<compile_context>
chip_gen: v7x
topology: tpu7x:2x2x1
jax: 0.10.0
libtpu: 0.0.40
codegen_flags: <defaults>
</compile_context>

<pallas_src>
import math
import numpy as np
import jax
import jax.numpy as jnp
from jax import lax
from jax.experimental import pallas as pl
from jax.experimental.pallas import tpu as pltpu


# ----------------------------------------------------------------------------
# DCT filter construction (host-side glue, matches the PyTorch buffer)
# ----------------------------------------------------------------------------
def get_freq_indices(method):
    assert method in ['top1', 'top2', 'top4', 'top8', 'top16', 'top32',
                      'bot1', 'bot2', 'bot4', 'bot8', 'bot16', 'bot32',
                      'low1', 'low2', 'low4', 'low8', 'low16', 'low32']
    num_freq = int(method[3:])
    if 'top' in method:
        all_x = [0, 0, 6, 0, 0, 1, 1, 4, 5, 1, 3, 0, 0, 0, 3, 2,
                 4, 6, 3, 5, 5, 2, 6, 5, 5, 3, 3, 4, 2, 2, 6, 1]
        all_y = [0, 1, 0, 5, 2, 0, 2, 0, 0, 6, 0, 4, 6, 3, 5, 2,
                 6, 3, 3, 3, 5, 1, 1, 2, 4, 2, 1, 1, 3, 0, 5, 3]
    elif 'low' in method:
        all_x = [0, 0, 1, 1, 0, 2, 2, 1, 2, 0, 3, 4, 0, 1, 3, 0,
                 1, 2, 3, 4, 5, 0, 1, 2, 3, 4, 5, 6, 1, 2, 3, 4]
        all_y = [0, 1, 0, 1, 2, 0, 1, 2, 2, 3, 0, 0, 4, 3, 1, 5,
                 4, 3, 2, 1, 0, 6, 5, 4, 3, 2, 1, 0, 6, 5, 4, 3]
    else:  # bot
        all_x = [6, 1, 3, 3, 2, 4, 1, 2, 4, 4, 5, 1, 4, 6, 2, 5,
                 6, 1, 6, 2, 2, 4, 3, 3, 5, 5, 6, 2, 5, 5, 3, 6]
        all_y = [6, 4, 4, 6, 6, 3, 1, 4, 4, 5, 6, 5, 2, 2, 5, 1,
                 4, 3, 5, 0, 3, 1, 1, 2, 4, 2, 1, 1, 5, 3, 3, 3]
    return all_x[:num_freq], all_y[:num_freq]


def build_filter(pos, freq, POS):
    result = math.cos(math.pi * freq * (pos + 0.5) / POS) / math.sqrt(POS)
    if freq == 0:
        return result
    return result * math.sqrt(2)


def get_dct_filter(tile_size_x, tile_size_y, mapper_x, mapper_y, channel):
    dct_filter = np.zeros((channel, tile_size_x, tile_size_y), dtype=np.float32)
    c_part = channel // len(mapper_x)
    for i, (u_x, v_y) in enumerate(zip(mapper_x, mapper_y)):
        for t_x in range(tile_size_x):
            for t_y in range(tile_size_y):
                dct_filter[i * c_part:(i + 1) * c_part, t_x, t_y] = (
                    build_filter(t_x, u_x, tile_size_x)
                    * build_filter(t_y, v_y, tile_size_y))
    return dct_filter


# ----------------------------------------------------------------------------
# Pallas kernel: fused DCT pooling + gate MLP + channel gating + residual + ReLU
# ----------------------------------------------------------------------------
def _fca_att_kernel(x_ref, res_ref, dctw_ref, w1t_ref, w2t_ref, o_ref):
    # x_ref, res_ref, o_ref : (TB, C, HW)   lane axis = HW (dense, large)
    # dctw_ref              : (C, HW)       DCT filter (adaptive pool folded in)
    # w1t_ref               : (C, Cr)       fc1 weight, pre-transposed
    # w2t_ref               : (Cr, C)       fc2 weight, pre-transposed
    x = x_ref[...].astype(jnp.float32)                       # (TB, C, HW)

    # frequency-weighted global pooling: VPU multiply + cross-lane reduce (XLU)
    y = jnp.sum(x * dctw_ref[...][None, :, :], axis=2)       # (TB, C), f32 acc

    # bottleneck gate MLP, batched over the TB batch elements of this block
    h = jnp.dot(y, w1t_ref[...], preferred_element_type=jnp.float32)   # (TB, Cr)
    h = jnp.maximum(h, 0.0)
    s = jnp.dot(h, w2t_ref[...], preferred_element_type=jnp.float32)   # (TB, C)
    s = jax.nn.sigmoid(s)                                    # EUP

    # channel gating + residual add + final ReLU, fully fused
    out = x * s[:, :, None] + res_ref[...].astype(jnp.float32)
    o_ref[...] = jnp.maximum(out, 0.0).astype(o_ref.dtype)


def _pick_batch_tile(n, c, hw, itemsize=4, vmem_budget=24 * 1024 * 1024):
    """Largest batch tile whose double-buffered blocks fit the VMEM budget,
    preferring >= 2 grid steps (v7x has 2 TensorCores per chip)."""
    def vmem_bytes(tb):
        # x, residual, out blocks (double-buffered) + resident DCT weight
        return (3 * 2 * tb + 2) * c * hw * itemsize
    divisors = [d for d in range(1, n + 1) if n % d == 0]
    feasible = [d for d in divisors if vmem_bytes(d) <= vmem_budget] or [1]
    multi_step = [d for d in feasible if n // d >= 2]
    return max(multi_step) if multi_step else max(feasible)


def fca_attention_residual_relu(x, residual, dct_weight, fc1_w, fc2_w,
                                dct_h, dct_w):
    """relu( x * sigmoid(fc2(relu(fc1(dct_pool(x))))) + residual )."""
    n, c, h, w = x.shape
    cr = fc1_w.shape[0]

    if (h, w) != (dct_h, dct_w):
        # Fold adaptive average pooling into the DCT weight (exact for the
        # integer-divisible case FcaNet uses), so the kernel reads x only once.
        # TODO(synk): general non-divisible adaptive_avg_pool2d not implemented.
        assert h % dct_h == 0 and w % dct_w == 0
        kh, kw = h // dct_h, w // dct_w
        dctw_full = jnp.repeat(jnp.repeat(dct_weight, kh, axis=1), kw, axis=2)
        dctw_full = dctw_full / float(kh * kw)
    else:
        dctw_full = dct_weight

    hw = h * w
    x_flat = x.reshape(n, c, hw)
    res_flat = residual.reshape(n, c, hw)
    dctw_flat = dctw_full.reshape(c, hw).astype(jnp.float32)
    w1t = fc1_w.T.astype(jnp.float32)          # (C, Cr)
    w2t = fc2_w.T.astype(jnp.float32)          # (Cr, C)

    tb = _pick_batch_tile(n, c, hw, x.dtype.itemsize)
    grid = (n // tb,)

    out = pl.pallas_call(
        _fca_att_kernel,
        out_shape=jax.ShapeDtypeStruct((n, c, hw), x.dtype),
        grid_spec=pltpu.PrefetchScalarGridSpec(
            num_scalar_prefetch=0,
            grid=grid,
            in_specs=[
                pl.BlockSpec((tb, c, hw), lambda i: (i, 0, 0)),   # x
                pl.BlockSpec((tb, c, hw), lambda i: (i, 0, 0)),   # residual
                # constant-index-map weights stay resident across grid steps
                pl.BlockSpec((c, hw), lambda i: (0, 0)),          # DCT weight
                pl.BlockSpec((c, cr), lambda i: (0, 0)),          # fc1^T
                pl.BlockSpec((cr, c), lambda i: (0, 0)),          # fc2^T
            ],
            out_specs=pl.BlockSpec((tb, c, hw), lambda i: (i, 0, 0)),
        ),
        compiler_params=pltpu.CompilerParams(
            dimension_semantics=("parallel",)),
    )(x_flat, res_flat, dctw_flat, w1t, w2t)

    return out.reshape(n, c, h, w)


# ----------------------------------------------------------------------------
# FcaBasicBlock forward (convs/BN in XLA, fused attention epilogue in Pallas)
# ----------------------------------------------------------------------------
def _conv3x3(x, w, stride=1):
    return lax.conv_general_dilated(
        x, w, window_strides=(stride, stride), padding=((1, 1), (1, 1)),
        dimension_numbers=('NCHW', 'OIHW', 'NCHW'))


def _batchnorm(x, gamma, beta, mean, var, eps=1e-5):
    # inference-mode BatchNorm2d
    inv = gamma / jnp.sqrt(var + eps)
    return x * inv[None, :, None, None] + (beta - mean * inv)[None, :, None, None]


def fca_basic_block_forward(x, params, dct_h, dct_w, stride=1):
    """conv1 -> bn1 -> relu -> conv2 -> bn2 -> [Pallas: MSA att + residual + relu].
    Identity shortcut (downsample=None)."""
    out = _conv3x3(x, params['conv1_w'], stride)
    out = _batchnorm(out, *params['bn1'])
    out = jnp.maximum(out, 0.0)
    out = _conv3x3(out, params['conv2_w'], 1)
    out = _batchnorm(out, *params['bn2'])
    residual = x
    return fca_attention_residual_relu(
        out, residual, params['dct_weight'], params['fc1_w'], params['fc2_w'],
        dct_h, dct_w)


# Pure-JAX reference for verification
def reference_block(x, params, dct_h, dct_w, stride=1):
    out = _conv3x3(x, params['conv1_w'], stride)
    out = _batchnorm(out, *params['bn1'])
    out = jnp.maximum(out, 0.0)
    out = _conv3x3(out, params['conv2_w'], 1)
    out = _batchnorm(out, *params['bn2'])
    n, c, h, w = out.shape
    if (h, w) != (dct_h, dct_w):
        xp = out.reshape(n, c, dct_h, h // dct_h, dct_w, w // dct_w).mean(axis=(3, 5))
    else:
        xp = out
    y = jnp.sum(xp * params['dct_weight'][None], axis=(2, 3))      # (N, C)
    hdn = jnp.maximum(y @ params['fc1_w'].T, 0.0)                   # (N, Cr)
    s = jax.nn.sigmoid(hdn @ params['fc2_w'].T)                     # (N, C)
    out = out * s[:, :, None, None]
    return jnp.maximum(out + x, 0.0)


if __name__ == "__main__":
    # FcaBasicBlock config: planes=64 -> c2wh[64] = 56 (smallest standard
    # FcaNet stage; channel must be a multiple of 16 for 'top16').
    N = 2
    INPLANES = PLANES = 64
    H = W = 56                      # equals dct size -> adaptive pool is identity
    DCT_H = DCT_W = 56
    REDUCTION = 16
    FREQ_METHOD = 'top16'
    STRIDE = 1

    mapper_x, mapper_y = get_freq_indices(FREQ_METHOD)
    mapper_x = [mx * (DCT_H // 7) for mx in mapper_x]
    mapper_y = [my * (DCT_W // 7) for my in mapper_y]
    dct_weight = jnp.asarray(
        get_dct_filter(DCT_H, DCT_W, mapper_x, mapper_y, PLANES))

    key = jax.random.PRNGKey(0)
    kx, k1, k2, k3, k4, kb = jax.random.split(key, 6)
    cr = PLANES // REDUCTION

    params = {
        'conv1_w': jax.random.normal(k1, (PLANES, INPLANES, 3, 3), jnp.float32)
                   * (1.0 / math.sqrt(9 * INPLANES)),
        'conv2_w': jax.random.normal(k2, (PLANES, PLANES, 3, 3), jnp.float32)
                   * (1.0 / math.sqrt(9 * PLANES)),
        # (gamma, beta, running_mean, running_var)
        'bn1': (jnp.ones((PLANES,), jnp.float32),
                jnp.zeros((PLANES,), jnp.float32),
                jax.random.normal(kb, (PLANES,), jnp.float32) * 0.1,
                jnp.ones((PLANES,), jnp.float32)),
        'bn2': (jnp.ones((PLANES,), jnp.float32),
                jnp.zeros((PLANES,), jnp.float32),
                jnp.zeros((PLANES,), jnp.float32),
                jnp.ones((PLANES,), jnp.float32)),
        'fc1_w': jax.random.normal(k3, (cr, PLANES), jnp.float32)
                 * (1.0 / math.sqrt(PLANES)),
        'fc2_w': jax.random.normal(k4, (PLANES, cr), jnp.float32)
                 * (1.0 / math.sqrt(cr)),
        'dct_weight': dct_weight,
    }

    x = jax.random.normal(kx, (N, INPLANES, H, W), dtype=jnp.float32)

    out = fca_basic_block_forward(x, params, DCT_H, DCT_W, STRIDE)
    out = jax.block_until_ready(out)

    ref = reference_block(x, params, DCT_H, DCT_W, STRIDE)
    assert out.shape == (N, PLANES, H, W)
    np.testing.assert_allclose(np.asarray(out), np.asarray(ref),
                               rtol=1e-4, atol=1e-4)

    print("KERNEL_OK")
</pallas_src>

<mosaic_0001>
module attributes {stable_mosaic.version = 11 : i64} {
  func.func @_fca_att_kernel(%arg0: i32, %arg1: memref<1x64x3136xf32, #tpu.memory_space<vmem>>, %arg2: memref<1x64x3136xf32, #tpu.memory_space<vmem>>, %arg3: memref<64x3136xf32, #tpu.memory_space<vmem>>, %arg4: memref<64x4xf32, #tpu.memory_space<vmem>>, %arg5: memref<4x64xf32, #tpu.memory_space<vmem>>, %arg6: memref<1x64x3136xf32, #tpu.memory_space<vmem>>) attributes {dimension_semantics = [#tpu.dimension_semantics<parallel>], iteration_bounds = array<i64: 2>, scalar_prefetch = 0 : i64, scratch_operands = 0 : i64, tpu.core_type = #tpu.core_type<tc>, window_params = [{transform_indices = @transform_0, window_bounds = array<i64: 1, 64, 3136>}, {transform_indices = @transform_1, window_bounds = array<i64: 1, 64, 3136>}, {pipeline_mode = #tpu.pipeline_mode<synchronous>, transform_indices = @transform_2, window_bounds = array<i64: 64, 3136>}, {pipeline_mode = #tpu.pipeline_mode<synchronous>, transform_indices = @transform_3, window_bounds = array<i64: 64, 4>}, {pipeline_mode = #tpu.pipeline_mode<synchronous>, transform_indices = @transform_4, window_bounds = array<i64: 4, 64>}, {transform_indices = @transform_5, window_bounds = array<i64: 1, 64, 3136>}]} {
    %c0 = arith.constant 0 : index
    %c0_0 = arith.constant 0 : index
    %c0_1 = arith.constant 0 : index
    %0 = vector.load %arg1[%c0, %c0_0, %c0_1] : memref<1x64x3136xf32, #tpu.memory_space<vmem>>, vector<1x64x3136xf32>
    %c0_2 = arith.constant 0 : index
    %c0_3 = arith.constant 0 : index
    %1 = vector.load %arg3[%c0_2, %c0_3] : memref<64x3136xf32, #tpu.memory_space<vmem>>, vector<64x3136xf32>
    %2 = vector.shape_cast %1 : vector<64x3136xf32> to vector<1x64x3136xf32>
    %3 = arith.mulf %0, %2 : vector<1x64x3136xf32>
    %cst = arith.constant dense<0.000000e+00> : vector<1x64xf32>
    %4 = vector.multi_reduction <add>, %3, %cst [2] : vector<1x64x3136xf32> to vector<1x64xf32>
    %c0_4 = arith.constant 0 : index
    %c0_5 = arith.constant 0 : index
    %5 = vector.load %arg4[%c0_4, %c0_5] : memref<64x4xf32, #tpu.memory_space<vmem>>, vector<64x4xf32>
    %cst_6 = arith.constant dense<0.000000e+00> : vector<1x4xf32>
    %6 = tpu.matmul %4, %5, %cst_6 {dimension_numbers = #tpu.dot_dimension_numbers<[1], [0], [0], [1], [0, 0, 1, 1], [], []>} : vector<1x64xf32>, vector<64x4xf32>, vector<1x4xf32> -> vector<1x4xf32>
    %cst_7 = arith.constant 0.000000e+00 : f32
    %7 = vector.broadcast %cst_7 : f32 to vector<1x4xf32>
    %8 = arith.maximumf %6, %7 : vector<1x4xf32>
    %c0_8 = arith.constant 0 : index
    %c0_9 = arith.constant 0 : index
    %9 = vector.load %arg5[%c0_8, %c0_9] : memref<4x64xf32, #tpu.memory_space<vmem>>, vector<4x64xf32>
    %cst_10 = arith.constant dense<0.000000e+00> : vector<1x64xf32>
    %10 = tpu.matmul %8, %9, %cst_10 {dimension_numbers = #tpu.dot_dimension_numbers<[1], [0], [0], [1], [0, 0, 1, 1], [], []>} : vector<1x4xf32>, vector<4x64xf32>, vector<1x64xf32> -> vector<1x64xf32>
    %11 = arith.negf %10 : vector<1x64xf32>
    %12 = math.exp %11 : vector<1x64xf32>
    %cst_11 = arith.constant 1.000000e+00 : f32
    %13 = vector.broadcast %cst_11 : f32 to vector<1x64xf32>
    %14 = arith.addf %13, %12 : vector<1x64xf32>
    %15 = arith.divf %13, %14 : vector<1x64xf32>
    %16 = vector.shape_cast %15 : vector<1x64xf32> to vector<1x64x1xf32>
    %17 = vector.broadcast %16 : vector<1x64x1xf32> to vector<1x64x3136xf32>
    %18 = arith.mulf %0, %17 : vector<1x64x3136xf32>
    %c0_12 = arith.constant 0 : index
    %c0_13 = arith.constant 0 : index
    %c0_14 = arith.constant 0 : index
    %19 = vector.load %arg2[%c0_12, %c0_13, %c0_14] : memref<1x64x3136xf32, #tpu.memory_space<vmem>>, vector<1x64x3136xf32>
    %20 = arith.addf %18, %19 : vector<1x64x3136xf32>
    %cst_15 = arith.constant 0.000000e+00 : f32
    %21 = vector.broadcast %cst_15 : f32 to vector<1x64x3136xf32>
    %22 = arith.maximumf %20, %21 : vector<1x64x3136xf32>
    %c0_16 = arith.constant 0 : index
    %c0_17 = arith.constant 0 : index
    %c0_18 = arith.constant 0 : index
    %23 = vector.load %arg6[%c0_16, %c0_17, %c0_18] : memref<1x64x3136xf32, #tpu.memory_space<vmem>>, vector<1x64x3136xf32>
    tpu.vector_store %arg6[%c0_16, %c0_17, %c0_18], %22 {strides = array<i32>} : memref<1x64x3136xf32, #tpu.memory_space<vmem>>, vector<1x64x3136xf32>,
    return
  }
  func.func @transform_0(%arg0: i32) -> (i32, i32, i32) {
    %c0_i32 = arith.constant 0 : i32
    %c0_i32_0 = arith.constant 0 : i32
    %c0_i32_1 = arith.constant 0 : i32
    return %arg0, %c0_i32, %c0_i32_0 : i32, i32, i32
  }
  func.func @transform_1(%arg0: i32) -> (i32, i32, i32) {
    %c0_i32 = arith.constant 0 : i32
    %c0_i32_0 = arith.constant 0 : i32
    %c0_i32_1 = arith.constant 0 : i32
    return %arg0, %c0_i32, %c0_i32_0 : i32, i32, i32
  }
  func.func @transform_2(%arg0: i32) -> (i32, i32) {
    %c0_i32 = arith.constant 0 : i32
    %c0_i32_0 = arith.constant 0 : i32
    %c0_i32_1 = arith.constant 0 : i32
    return %c0_i32, %c0_i32_0 : i32, i32
  }
  func.func @transform_3(%arg0: i32) -> (i32, i32) {
    %c0_i32 = arith.constant 0 : i32
    %c0_i32_0 = arith.constant 0 : i32
    %c0_i32_1 = arith.constant 0 : i32
    return %c0_i32, %c0_i32_0 : i32, i32
  }
  func.func @transform_4(%arg0: i32) -> (i32, i32) {
    %c0_i32 = arith.constant 0 : i32
    %c0_i32_0 = arith.constant 0 : i32
    %c0_i32_1 = arith.constant 0 : i32
    return %c0_i32, %c0_i32_0 : i32, i32
  }
  func.func @transform_5(%arg0: i32) -> (i32, i32, i32) {
    %c0_i32 = arith.constant 0 : i32
    %c0_i32_0 = arith.constant 0 : i32
    %c0_i32_1 = arith.constant 0 : i32
    return %arg0, %c0_i32, %c0_i32_0 : i32, i32, i32
  }
}

</mosaic_0001>

<llo_original>
// kernel: tpu_custom_call.1
$region0: #{tpu_custom_call.1}
  #allocation0 [shape = 'u32[]', space=smem, size = 0x4, offset = 0x4, fixed_abs, tag = 'smem constant byte address 0x4 - core index']
  #allocation1 [shape = 'u32[144,128]{1,0:T(1,128)}', space=vmem, size = 0x12000, scoped, tag = 'internal scratch']
  %s0 = inlined_call_operand.hbm [shape: f32[2,64,3136], index: 0, kind: input, shape index: {}]
  %s1 = inlined_call_operand.hbm [shape: f32[2,64,3136], index: 1, kind: input, shape index: {}]
  %s2 = inlined_call_operand.hbm [shape: f32[64,3136], index: 2, kind: input, shape index: {}]
  %s3 = inlined_call_operand.vmem [shape: f32[64,4], index: 3, kind: input, shape index: {}]
  %s4 = inlined_call_operand.hbm [shape: f32[4,64], index: 4, kind: input, shape index: {}]
  %s5 = inlined_call_operand.hbm [shape: f32[2,64,3136], index: 5, kind: output, shape index: {}]
  %s6 = sld [smem:[#allocation0]]
  $region69: #{tpu_custom_call.1} parent=0
    _
  %s8 = ssub.s32 1, %s6
  %s9 = scalar_select 0, %s8, %s6
  $region1: #{tpu_custom_call.1} parent=0
    #allocation2 [shape = 'u8[1638400]{0}', space=vmem, size = 0x190000, scoped, tag = 'input window, operand 0']
    #allocation3 [shape = 's32[2]{0}', space=sflag, size = 0x8, scoped, tag = 'scoped memory for tpu_custom_call.1']
    #allocation4 [shape = 's32[2]{0}', space=sflag, size = 0x8, scoped, tag = 'scoped memory for tpu_custom_call.1']
    #allocation5 [shape = 'u8[1638400]{0}', space=vmem, size = 0x190000, scoped, tag = 'input window, operand 1']
    #allocation6 [shape = 's32[2]{0}', space=sflag, size = 0x8, scoped, tag = 'scoped memory for tpu_custom_call.1']
    #allocation7 [shape = 'u8[819200]{0}', space=vmem, size = 0xc8000, scoped, tag = 'input window, operand 2, single buffered']
    #allocation8 [shape = 'u8[2048]{0}', space=vmem, size = 0x800, scoped, tag = 'input window, operand 4, single buffered']
    #allocation9 [shape = 's32[1]{0}', space=sflag, size = 0x4, scoped, tag = 'scoped memory for tpu_custom_call.1']
    #allocation10 [shape = 'u8[1638400]{0}', space=vmem, size = 0x190000, scoped, tag = 'output window, operand 0']
    %10 = vsyncpa [#allocation3], 0
    %s11 = scalar_lea.sflag [#allocation3], 1
    %12 = vsyncpa %s11, 0
    %13 = vsyncpa [#allocation6], 0
    %s14 = scalar_lea.sflag [#allocation6], 1
    %15 = vsyncpa %s14, 0
    %16 = vsyncpa [#allocation9], 0
    %17 = vsyncpa [#allocation4], 0
    %s18 = scalar_lea.sflag [#allocation4], 1
    %19 = vsyncpa %s18, 0
    loop: start=0, step=1, limit=4
    $region2: #{tpu_custom_call.1} parent=1 // loop_pre_header
      _
    $region3: #{tpu_custom_call.1} parent=1 // loop_header
      %s21 = sphi 0, %s25
      %p22 = scmp.ge.s32.totalorder %s21, 4
      %s31 = sphi 0, %s33
      %s34 = sphi 0, %s31
      %s35 = sphi 0, %s34
      %s51 = sphi 0, %s35
      %s57 = sphi 0, %s59
      %s60 = sphi 0, %s57
      %s61 = sphi 0, %s60
      %s77 = sphi 0, %s61
      %s81 = sphi 0, %s81
      %s83 = sphi 0, %s81
      %s84 = sphi 0, %s83
      %s98 = sphi 0, %s84
      %s102 = sphi 0, %s102
      %s104 = sphi 0, %s102
      %s105 = sphi 0, %s104
      %s119 = sphi 0, %s105
      %s123 = sphi 0, %s123
      %s125 = sphi 0, %s123
      %s126 = sphi 0, %s125
      %s140 = sphi 0, %s126
      %s146 = sphi 0, %s148
      %s149 = sphi 0, %s146
      %s150 = sphi 0, %s149
      %s166 = sphi 0, %s150
    $region4: #{tpu_custom_call.1} parent=1 // loop_header_branch
      %24 = sbr.rel (%p22) target = $region8
    $region5: #{tpu_custom_call.1} parent=1 // loop_body
      %s26 = ssub.s32 %s21, 1
      %s27 = ssub.s32 %s21, 2
      %s28 = sadd.s32 %s21, 1
      %s29 = ssub.s32 %s21, %s28
      %p30 = scmp.eq.s32.totalorder %s29, 0
      %s32 = sadd.s32 %s31, 1
      %s33 = scalar_select %p30, %s31, %s32
      %p36 = pneg %p30
      %p37 = scmp.eq.s32.totalorder %s21, 1
      %p38 = por %p36, %p37
      %p39 = scmp.ne.s32.totalorder %s31, %s34
      %p40 = scmp.eq.s32.totalorder %s21, 0
      %p41 = por %p39, %p40
      %p42 = scmp.ne.s32.totalorder %s31, %s34
      %p43 = scmp.eq.s32.totalorder %s26, 1
      %p44 = por %p42, %p43
      %p45 = scmp.ne.s32.totalorder %s34, %s35
      %p46 = scmp.eq.s32.totalorder %s26, 0
      %p47 = por %p45, %p46
      %p48 = scmp.ne.s32.totalorder %s34, %s35
      %p49 = scmp.eq.s32.totalorder %s27, 1
      %p50 = por %p48, %p49
      %p52 = scmp.ne.s32.totalorder %s35, %s51
      %p53 = scmp.eq.s32.totalorder %s27, 0
      %p54 = por %p52, %p53
      %s55 = ssub.s32 %s21, %s28
      %p56 = scmp.eq.s32.totalorder %s55, 0
      %s58 = sadd.s32 %s57, 1
      %s59 = scalar_select %p56, %s57, %s58
      %p62 = pneg %p56
      %p63 = scmp.eq.s32.totalorder %s21, 1
      %p64 = por %p62, %p63
      %p65 = scmp.ne.s32.totalorder %s57, %s60
      %p66 = scmp.eq.s32.totalorder %s21, 0
      %p67 = por %p65, %p66
      %p68 = scmp.ne.s32.totalorder %s57, %s60
      %p69 = scmp.eq.s32.totalorder %s26, 1
      %p70 = por %p68, %p69
      %p71 = scmp.ne.s32.totalorder %s60, %s61
      %p72 = scmp.eq.s32.totalorder %s26, 0
      %p73 = por %p71, %p72
      %p74 = scmp.ne.s32.totalorder %s60, %s61
      %p75 = scmp.eq.s32.totalorder %s27, 1
      %p76 = por %p74, %p75
      %p78 = scmp.ne.s32.totalorder %s61, %s77
      %p79 = scmp.eq.s32.totalorder %s27, 0
      %p80 = por %p78, %p79
      %s82 = sadd.s32 %s81, 1
      %p85 = scmp.eq.s32.totalorder %s21, 1
      %p86 = scmp.ne.s32.totalorder %s81, %s83
      %p87 = scmp.eq.s32.totalorder %s21, 0
      %p88 = por %p86, %p87
      %p89 = scmp.ne.s32.totalorder %s81, %s83
      %p90 = scmp.eq.s32.totalorder %s26, 1
      %p91 = por %p89, %p90
      %p92 = scmp.ne.s32.totalorder %s83, %s84
      %p93 = scmp.eq.s32.totalorder %s26, 0
      %p94 = por %p92, %p93
      %p95 = scmp.ne.s32.totalorder %s83, %s84
      %p96 = scmp.eq.s32.totalorder %s27, 1
      %p97 = por %p95, %p96
      %p99 = scmp.ne.s32.totalorder %s84, %s98
      %p100 = scmp.eq.s32.totalorder %s27, 0
      %p101 = por %p99, %p100
      %s103 = sadd.s32 %s102, 1
      %p106 = scmp.eq.s32.totalorder %s21, 1
      %p107 = scmp.ne.s32.totalorder %s102, %s104
      %p108 = scmp.eq.s32.totalorder %s21, 0
      %p109 = por %p107, %p108
      %p110 = scmp.ne.s32.totalorder %s102, %s104
      %p111 = scmp.eq.s32.totalorder %s26, 1
      %p112 = por %p110, %p111
      %p113 = scmp.ne.s32.totalorder %s104, %s105
      %p114 = scmp.eq.s32.totalorder %s26, 0
      %p115 = por %p113, %p114
      %p116 = scmp.ne.s32.totalorder %s104, %s105
      %p117 = scmp.eq.s32.totalorder %s27, 1
      %p118 = por %p116, %p117
      %p120 = scmp.ne.s32.totalorder %s105, %s119
      %p121 = scmp.eq.s32.totalorder %s27, 0
      %p122 = por %p120, %p121
      %s124 = sadd.s32 %s123, 1
      %p127 = scmp.eq.s32.totalorder %s21, 1
      %p128 = scmp.ne.s32.totalorder %s123, %s125
      %p129 = scmp.eq.s32.totalorder %s21, 0
      %p130 = por %p128, %p129
      %p131 = scmp.ne.s32.totalorder %s123, %s125
      %p132 = scmp.eq.s32.totalorder %s26, 1
      %p133 = por %p131, %p132
      %p134 = scmp.ne.s32.totalorder %s125, %s126
      %p135 = scmp.eq.s32.totalorder %s26, 0
      %p136 = por %p134, %p135
      %p137 = scmp.ne.s32.totalorder %s125, %s126
      %p138 = scmp.eq.s32.totalorder %s27, 1
      %p139 = por %p137, %p138
      %p141 = scmp.ne.s32.totalorder %s126, %s140
      %p142 = scmp.eq.s32.totalorder %s27, 0
      %p143 = por %p141, %p142
      %s144 = ssub.s32 %s21, %s28
      %p145 = scmp.eq.s32.totalorder %s144, 0
      %s147 = sadd.s32 %s146, 1
      %s148 = scalar_select %p145, %s146, %s147
      %p151 = pneg %p145
      %p152 = scmp.eq.s32.totalorder %s21, 1
      %p153 = por %p151, %p152
      %p154 = scmp.ne.s32.totalorder %s146, %s149
      %p155 = scmp.eq.s32.totalorder %s21, 0
      %p156 = por %p154, %p155
      %p157 = scmp.ne.s32.totalorder %s146, %s149
      %p158 = scmp.eq.s32.totalorder %s26, 1
      %p159 = por %p157, %p158
      %p160 = scmp.ne.s32.totalorder %s149, %s150
      %p161 = scmp.eq.s32.totalorder %s26, 0
      %p162 = por %p160, %p161
      %p163 = scmp.ne.s32.totalorder %s149, %s150
      %p164 = scmp.eq.s32.totalorder %s27, 1
      %p165 = por %p163, %p164
      %p167 = scmp.ne.s32.totalorder %s150, %s166
      %p168 = scmp.eq.s32.totalorder %s27, 0
      %p169 = por %p167, %p168
      %p170 = scmp.le.s32.totalorder 1, %s21
      %p171 = scmp.lt.s32.totalorder %s21, 3
      %p172 = pnand %p170, %p171
      %p173 = pneg %p172
      // Predicated region
      $region9: #{tpu_custom_call.1} parent=5 // pred_check
        _
      $region10: #{tpu_custom_call.1} parent=5 // pred_check_branch
        %175 = sbr.rel (%p172) target = $region12
      $region11: #{tpu_custom_call.1} parent=5 // pred_region
        %s176 = ssub.s32 %s21, 1
        // Predicated region
        $region13: #{tpu_custom_call.1} parent=11 // pred_check
          %p177 = pneg %p94
        $region14: #{tpu_custom_call.1} parent=11 // pred_check_branch
          %179 = sbr.rel (%p177) target = $region16
        $region15: #{tpu_custom_call.1} parent=11 // pred_region
          %s181 = ssub.s32 25600, 25600
          %182 = vsyncadd [#allocation6], %s181
          %s183 = sshll.u32 [#allocation7], 4
          %s184 = int_to_ptr.vmem [resolvable:$true] %s183
          %189 = dma.hbm_to_vmem [thread:$0]  %s2, 25600, %s184, [#allocation6], 3200, 3200, 200
        $region16: #{tpu_custom_call.1} parent=11 // pred_fallthru
          _
        // Predicated region
        $region17: #{tpu_custom_call.1} parent=11 // pred_check
          %p190 = pneg %p115
        $region18: #{tpu_custom_call.1} parent=11 // pred_check_branch
          %192 = sbr.rel (%p190) target = $region20
        $region19: #{tpu_custom_call.1} parent=11 // pred_region
          _
        $region20: #{tpu_custom_call.1} parent=11 // pred_fallthru
          _
        // Predicated region
        $region21: #{tpu_custom_call.1} parent=11 // pred_check
          %p193 = pneg %p136
        $region22: #{tpu_custom_call.1} parent=11 // pred_check_branch
          %195 = sbr.rel (%p193) target = $region24
        $region23: #{tpu_custom_call.1} parent=11 // pred_region
          %s197 = ssub.s32 64, 64
          %198 = vsyncadd [#allocation9], %s197
          %s200 = sshll.u32 [#allocation8], 4
          %s201 = int_to_ptr.vmem [resolvable:$true] %s200
          %203 = dma.hbm_to_vmem [thread:$0]  %s4, 64, %s201, [#allocation9]
        $region24: #{tpu_custom_call.1} parent=11 // pred_fallthru
          _
      $region12: #{tpu_custom_call.1} parent=5 // pred_fallthru
        _
      %p204 = scmp.lt.s32.totalorder %s21, 2
      // Predicated region
      $region25: #{tpu_custom_call.1} parent=5 // pred_check
        %p205 = pneg %p204
      $region26: #{tpu_custom_call.1} parent=5 // pred_check_branch
        %207 = sbr.rel (%p205) target = $region28
      $region27: #{tpu_custom_call.1} parent=5 // pred_region
        // Predicated region
        $region29: #{tpu_custom_call.1} parent=27 // pred_check
          %p208 = pneg %p41
        $region30: #{tpu_custom_call.1} parent=27 // pred_check_branch
          %210 = sbr.rel (%p208) target = $region32
        $region31: #{tpu_custom_call.1} parent=27 // pred_region
          %s211 = sand.u32 %s31, 1
          %s212 = scalar_lea.sflag [#allocation3], %s211
          %s213 = sand.u32 %s31, 1
          %s214 = smul.addr %s213, 1600
          %s215 = scalar_lea.vmem [#allocation2], %s214
          %s217 = ssub.s32 25600, 25600
          %218 = vsyncadd %s212, %s217
          %s219 = smul.addr %s21, 200
          %s220 = smul.addr %s219, 128
          %s221 = scalar_lea.hbm %s0, %s220
          %s222 = sshll.u32 %s215, 4
          %s223 = int_to_ptr.vmem [resolvable:$true] %s222
          %228 = dma.hbm_to_vmem [thread:$0]  %s221, 25600, %s223, %s212, 3200, 3200, 200
        $region32: #{tpu_custom_call.1} parent=27 // pred_fallthru
          _
        // Predicated region
        $region33: #{tpu_custom_call.1} parent=27 // pred_check
          %p229 = pneg %p67
        $region34: #{tpu_custom_call.1} parent=27 // pred_check_branch
          %231 = sbr.rel (%p229) target = $region36
        $region35: #{tpu_custom_call.1} parent=27 // pred_region
          %s232 = sand.u32 %s21, 1
          %s233 = scalar_lea.sflag [#allocation6], %s232
          %s234 = sand.u32 %s57, 1
          %s235 = smul.addr %s234, 1600
          %s236 = scalar_lea.vmem [#allocation5], %s235
          %s238 = ssub.s32 25600, 25600
          %239 = vsyncadd %s233, %s238
          %s240 = smul.addr %s21, 200
          %s241 = smul.addr %s240, 128
          %s242 = scalar_lea.hbm %s1, %s241
          %s243 = sshll.u32 %s236, 4
          %s244 = int_to_ptr.vmem [resolvable:$true] %s243
          %249 = dma.hbm_to_vmem [thread:$0]  %s242, 25600, %s244, %s233, 3200, 3200, 200
        $region36: #{tpu_custom_call.1} parent=27 // pred_fallthru
          _
      $region28: #{tpu_custom_call.1} parent=5 // pred_fallthru
        _
      %p250 = scmp.le.s32.totalorder 1, %s21
      %p251 = scmp.lt.s32.totalorder %s21, 3
      %p252 = pnand %p250, %p251
      %p253 = pneg %p252
      // Predicated region
      $region37: #{tpu_custom_call.1} parent=5 // pred_check
        _
      $region38: #{tpu_custom_call.1} parent=5 // pred_check_branch
        %255 = sbr.rel (%p252) target = $region40
      $region39: #{tpu_custom_call.1} parent=5 // pred_region
        %s256 = ssub.s32 %s21, 1
        %s257 = sand.u32 %s34, 1
        %s258 = scalar_lea.sflag [#allocation3], %s257
        %s259 = sand.u32 %s34, 1
        %s260 = smul.addr %s259, 1600
        %s261 = scalar_lea.vmem [#allocation2], %s260
        // Predicated region
        $region41: #{tpu_custom_call.1} parent=39 // pred_check
          %p262 = pneg %p47
        $region42: #{tpu_custom_call.1} parent=39 // pred_check_branch
          %264 = sbr.rel (%p262) target = $region44
        $region43: #{tpu_custom_call.1} parent=39 // pred_region
          %265 = dma.done %s258, 25600
        $region44: #{tpu_custom_call.1} parent=39 // pred_fallthru
          _
        %s266 = sand.u32 %s26, 1
        %s267 = scalar_lea.sflag [#allocation6], %s266
        %s268 = sand.u32 %s60, 1
        %s269 = smul.addr %s268, 1600
        %s270 = scalar_lea.vmem [#allocation5], %s269
        // Predicated region
        $region45: #{tpu_custom_call.1} parent=39 // pred_check
          %p271 = pneg %p73
        $region46: #{tpu_custom_call.1} parent=39 // pred_check_branch
          %273 = sbr.rel (%p271) target = $region48
        $region47: #{tpu_custom_call.1} parent=39 // pred_region
          %274 = dma.done %s267, 25600
        $region48: #{tpu_custom_call.1} parent=39 // pred_fallthru
          _
        // Predicated region
        $region49: #{tpu_custom_call.1} parent=39 // pred_check
          %p275 = pneg %p94
        $region50: #{tpu_custom_call.1} parent=39 // pred_check_branch
          %277 = sbr.rel (%p275) target = $region52
        $region51: #{tpu_custom_call.1} parent=39 // pred_region
          %278 = dma.done [#allocation6], 25600
        $region52: #{tpu_custom_call.1} parent=39 // pred_fallthru
          _
        // Predicated region
        $region53: #{tpu_custom_call.1} parent=39 // pred_check
          %p279 = pneg %p136
        $region54: #{tpu_custom_call.1} parent=39 // pred_check_branch
          %281 = sbr.rel (%p279) target = $region56
        $region55: #{tpu_custom_call.1} parent=39 // pred_region
          %282 = dma.done [#allocation9], 64
        $region56: #{tpu_custom_call.1} parent=39 // pred_fallthru
          _
        %s283 = sand.u32 %s34, 1
        %s284 = scalar_lea.sflag [#allocation3], %s283
        %s285 = sand.u32 %s34, 1
        %s286 = smul.addr %s285, 1600
        %s287 = scalar_lea.vmem [#allocation2], %s286
        %p288 = pneg %p47
        %p289 = pneg %p44
        %s290 = sand.u32 %s26, 1
        %s291 = scalar_lea.sflag [#allocation6], %s290
        %s292 = sand.u32 %s60, 1
        %s293 = smul.addr %s292, 1600
        %s294 = scalar_lea.vmem [#allocation5], %s293
        %p295 = pneg %p73
        %p296 = pneg %p70
        %p297 = pneg %p94
        %p298 = pneg %p91
        %p299 = pneg %p115
        %p300 = pneg %p112
        %p301 = pneg %p136
        %p302 = pneg %p133
        %p303 = pneg %p162
        %p304 = pneg %p159
        %s305 = sand.u32 %s149, 1
        %s306 = scalar_lea.sflag [#allocation4], %s305
        %s307 = sand.u32 %s149, 1
        %s308 = smul.addr %s307, 1600
        %s309 = scalar_lea.vmem [#allocation10], %s308
        %v310 = vld [vmem:[%s261] sm:$0xff]
        %v311 = vld [vmem:[%s261 + $0x8] sm:$0xff]
        %v312 = vld [vmem:[%s261 + $0x10] sm:$0xff]
        %v313 = vld [vmem:[%s261 + $0x18] sm:$0xff]
        %v314 = vld [vmem:[%s261 + $0x20] sm:$0xff]
        %v315 = vld [vmem:[%s261 + $0x28] sm:$0xff]
        %v316 = vld [vmem:[%s261 + $0x30] sm:$0xff]
        %v317 = vld [vmem:[%s261 + $0x38] sm:$0xff]
        %v318 = vld [vmem:[%s261 + $0x40] sm:$0xff]
        %v319 = vld [vmem:[%s261 + $0x48] sm:$0xff]
        %v320 = vld [vmem:[%s261 + $0x50] sm:$0xff]
        %v321 = vld [vmem:[%s261 + $0x58] sm:$0xff]
        %v322 = vld [vmem:[%s261 + $0x60] sm:$0xff]
        %v323 = vld [vmem:[%s261 + $0x68] sm:$0xff]
        %v324 = vld [vmem:[%s261 + $0x70] sm:$0xff]
        %v325 = vld [vmem:[%s261 + $0x78] sm:$0xff]
        %v326 = vld [vmem:[%s261 + $0x80] sm:$0xff]
        %v327 = vld [vmem:[%s261 + $0x88] sm:$0xff]
        %v328 = vld [vmem:[%s261 + $0x90] sm:$0xff]
        %v329 = vld [vmem:[%s261 + $0x98] sm:$0xff]
        %v330 = vld [vmem:[%s261 + $0xa0] sm:$0xff]
        %v331 = vld [vmem:[%s261 + $0xa8] sm:$0xff]
        %v332 = vld [vmem:[%s261 + $0xb0] sm:$0xff]
        %v333 = vld [vmem:[%s261 + $0xb8] sm:$0xff]
        %v334 = vld [vmem:[%s261 + $0xc0] sm:$0xff]
        %v335 = vld [vmem:[%s261 + $0xc8] sm:$0xff]
        %v336 = vld [vmem:[%s261 + $0xd0] sm:$0xff]
        %v337 = vld [vmem:[%s261 + $0xd8] sm:$0xff]
        %v338 = vld [vmem:[%s261 + $0xe0] sm:$0xff]
        %v339 = vld [vmem:[%s261 + $0xe8] sm:$0xff]
        %v340 = vld [vmem:[%s261 + $0xf0] sm:$0xff]
        %v341 = vld [vmem:[%s261 + $0xf8] sm:$0xff]
        %v342 = vld [vmem:[%s261 + $0x100] sm:$0xff]
        %v343 = vld [vmem:[%s261 + $0x108] sm:$0xff]
        %v344 = vld [vmem:[%s261 + $0x110] sm:$0xff]
        %v345 = vld [vmem:[%s261 + $0x118] sm:$0xff]
        %v346 = vld [vmem:[%s261 + $0x120] sm:$0xff]
        %v347 = vld [vmem:[%s261 + $0x128] sm:$0xff]
        %v348 = vld [vmem:[%s261 + $0x130] sm:$0xff]
        %v349 = vld [vmem:[%s261 + $0x138] sm:$0xff]
        %v350 = vld [vmem:[%s261 + $0x140] sm:$0xff]
        %v351 = vld [vmem:[%s261 + $0x148] sm:$0xff]
        %v352 = vld [vmem:[%s261 + $0x150] sm:$0xff]
        %v353 = vld [vmem:[%s261 + $0x158] sm:$0xff]
        %v354 = vld [vmem:[%s261 + $0x160] sm:$0xff]
        %v355 = vld [vmem:[%s261 + $0x168] sm:$0xff]
        %v356 = vld [vmem:[%s261 + $0x170] sm:$0xff]
        %v357 = vld [vmem:[%s261 + $0x178] sm:$0xff]
        %v358 = vld [vmem:[%s261 + $0x180] sm:$0xff]
        %v359 = vld [vmem:[%s261 + $0x188] sm:$0xff]
        %v360 = vld [vmem:[%s261 + $0x190] sm:$0xff]
        %v361 = vld [vmem:[%s261 + $0x198] sm:$0xff]
        %v362 = vld [vmem:[%s261 + $0x1a0] sm:$0xff]
        %v363 = vld [vmem:[%s261 + $0x1a8] sm:$0xff]
        %v364 = vld [vmem:[%s261 + $0x1b0] sm:$0xff]
        %v365 = vld [vmem:[%s261 + $0x1b8] sm:$0xff]
        %v366 = vld [vmem:[%s261 + $0x1c0] sm:$0xff]
        %v367 = vld [vmem:[%s261 + $0x1c8] sm:$0xff]
        %v368 = vld [vmem:[%s261 + $0x1d0] sm:$0xff]
        %v369 = vld [vmem:[%s261 + $0x1d8] sm:$0xff]
        %v370 = vld [vmem:[%s261 + $0x1e0] sm:$0xff]
        %v371 = vld [vmem:[%s261 + $0x1e8] sm:$0xff]
        %v372 = vld [vmem:[%s261 + $0x1f0] sm:$0xff]
        %v373 = vld [vmem:[%s261 + $0x1f8] sm:$0xff]
        %v374 = vld [vmem:[%s261 + $0x200] sm:$0xff]
        %v375 = vld [vmem:[%s261 + $0x208] sm:$0xff]
        %v376 = vld [vmem:[%s261 + $0x210] sm:$0xff]
        %v377 = vld [vmem:[%s261 + $0x218] sm:$0xff]
        %v378 = vld [vmem:[%s261 + $0x220] sm:$0xff]
        %v379 = vld [vmem:[%s261 + $0x228] sm:$0xff]
        %v380 = vld [vmem:[%s261 + $0x230] sm:$0xff]
        %v381 = vld [vmem:[%s261 + $0x238] sm:$0xff]
        %v382 = vld [vmem:[%s261 + $0x240] sm:$0xff]
        %v383 = vld [vmem:[%s261 + $0x248] sm:$0xff]
        %v384 = vld [vmem:[%s261 + $0x250] sm:$0xff]
        %v385 = vld [vmem:[%s261 + $0x258] sm:$0xff]
        %v386 = vld [vmem:[%s261 + $0x260] sm:$0xff]
        %v387 = vld [vmem:[%s261 + $0x268] sm:$0xff]
        %v388 = vld [vmem:[%s261 + $0x270] sm:$0xff]
        %v389 = vld [vmem:[%s261 + $0x278] sm:$0xff]
        %v390 = vld [vmem:[%s261 + $0x280] sm:$0xff]
        %v391 = vld [vmem:[%s261 + $0x288] sm:$0xff]
        %v392 = vld [vmem:[%s261 + $0x290] sm:$0xff]
        %v393 = vld [vmem:[%s261 + $0x298] sm:$0xff]
        %v394 = vld [vmem:[%s261 + $0x2a0] sm:$0xff]
        %v395 = vld [vmem:[%s261 + $0x2a8] sm:$0xff]
        %v396 = vld [vmem:[%s261 + $0x2b0] sm:$0xff]
        %v397 = vld [vmem:[%s261 + $0x2b8] sm:$0xff]
        %v398 = vld [vmem:[%s261 + $0x2c0] sm:$0xff]
        %v399 = vld [vmem:[%s261 + $0x2c8] sm:$0xff]
        %v400 = vld [vmem:[%s261 + $0x2d0] sm:$0xff]
        %v401 = vld [vmem:[%s261 + $0x2d8] sm:$0xff]
        %v402 = vld [vmem:[%s261 + $0x2e0] sm:$0xff]
        %v403 = vld [vmem:[%s261 + $0x2e8] sm:$0xff]
        %v404 = vld [vmem:[%s261 + $0x2f0] sm:$0xff]
        %v405 = vld [vmem:[%s261 + $0x2f8] sm:$0xff]
        %v406 = vld [vmem:[%s261 + $0x300] sm:$0xff]
        %v407 = vld [vmem:[%s261 + $0x308] sm:$0xff]
        %v408 = vld [vmem:[%s261 + $0x310] sm:$0xff]
        %v409 = vld [vmem:[%s261 + $0x318] sm:$0xff]
        %v410 = vld [vmem:[%s261 + $0x320] sm:$0xff]
        %v411 = vld [vmem:[%s261 + $0x328] sm:$0xff]
        %v412 = vld [vmem:[%s261 + $0x330] sm:$0xff]
        %v413 = vld [vmem:[%s261 + $0x338] sm:$0xff]
        %v414 = vld [vmem:[%s261 + $0x340] sm:$0xff]
        %v415 = vld [vmem:[%s261 + $0x348] sm:$0xff]
        %v416 = vld [vmem:[%s261 + $0x350] sm:$0xff]
        %v417 = vld [vmem:[%s261 + $0x358] sm:$0xff]
        %v418 = vld [vmem:[%s261 + $0x360] sm:$0xff]
        %v419 = vld [vmem:[%s261 + $0x368] sm:$0xff]
        %v420 = vld [vmem:[%s261 + $0x370] sm:$0xff]
        %v421 = vld [vmem:[%s261 + $0x378] sm:$0xff]
        %v422 = vld [vmem:[%s261 + $0x380] sm:$0xff]
        %v423 = vld [vmem:[%s261 + $0x388] sm:$0xff]
        %v424 = vld [vmem:[%s261 + $0x390] sm:$0xff]
        %v425 = vld [vmem:[%s261 + $0x398] sm:$0xff]
        %v426 = vld [vmem:[%s261 + $0x3a0] sm:$0xff]
        %v427 = vld [vmem:[%s261 + $0x3a8] sm:$0xff]
        %v428 = vld [vmem:[%s261 + $0x3b0] sm:$0xff]
        %v429 = vld [vmem:[%s261 + $0x3b8] sm:$0xff]
        %v430 = vld [vmem:[%s261 + $0x3c0] sm:$0xff]
        %v431 = vld [vmem:[%s261 + $0x3c8] sm:$0xff]
        %v432 = vld [vmem:[%s261 + $0x3d0] sm:$0xff]
        %v433 = vld [vmem:[%s261 + $0x3d8] sm:$0xff]
        %v434 = vld [vmem:[%s261 + $0x3e0] sm:$0xff]
        %v435 = vld [vmem:[%s261 + $0x3e8] sm:$0xff]
        %v436 = vld [vmem:[%s261 + $0x3f0] sm:$0xff]
        %v437 = vld [vmem:[%s261 + $0x3f8] sm:$0xff]
        %v438 = vld [vmem:[%s261 + $0x400] sm:$0xff]
        %v439 = vld [vmem:[%s261 + $0x408] sm:$0xff]
        %v440 = vld [vmem:[%s261 + $0x410] sm:$0xff]
        %v441 = vld [vmem:[%s261 + $0x418] sm:$0xff]
        %v442 = vld [vmem:[%s261 + $0x420] sm:$0xff]
        %v443 = vld [vmem:[%s261 + $0x428] sm:$0xff]
        %v444 = vld [vmem:[%s261 + $0x430] sm:$0xff]
        %v445 = vld [vmem:[%s261 + $0x438] sm:$0xff]
        %v446 = vld [vmem:[%s261 + $0x440] sm:$0xff]
        %v447 = vld [vmem:[%s261 + $0x448] sm:$0xff]
        %v448 = vld [vmem:[%s261 + $0x450] sm:$0xff]
        %v449 = vld [vmem:[%s261 + $0x458] sm:$0xff]
        %v450 = vld [vmem:[%s261 + $0x460] sm:$0xff]
        %v451 = vld [vmem:[%s261 + $0x468] sm:$0xff]
        %v452 = vld [vmem:[%s261 + $0x470] sm:$0xff]
        %v453 = vld [vmem:[%s261 + $0x478] sm:$0xff]
        %v454 = vld [vmem:[%s261 + $0x480] sm:$0xff]
        %v455 = vld [vmem:[%s261 + $0x488] sm:$0xff]
        %v456 = vld [vmem:[%s261 + $0x490] sm:$0xff]
        %v457 = vld [vmem:[%s261 + $0x498] sm:$0xff]
        %v458 = vld [vmem:[%s261 + $0x4a0] sm:$0xff]
        %v459 = vld [vmem:[%s261 + $0x4a8] sm:$0xff]
        %v460 = vld [vmem:[%s261 + $0x4b0] sm:$0xff]
        %v461 = vld [vmem:[%s261 + $0x4b8] sm:$0xff]
        %v462 = vld [vmem:[%s261 + $0x4c0] sm:$0xff]
        %v463 = vld [vmem:[%s261 + $0x4c8] sm:$0xff]
        %v464 = vld [vmem:[%s261 + $0x4d0] sm:$0xff]
        %v465 = vld [vmem:[%s261 + $0x4d8] sm:$0xff]
        %v466 = vld [vmem:[%s261 + $0x4e0] sm:$0xff]
        %v467 = vld [vmem:[%s261 + $0x4e8] sm:$0xff]
        %v468 = vld [vmem:[%s261 + $0x4f0] sm:$0xff]
        %v469 = vld [vmem:[%s261 + $0x4f8] sm:$0xff]
        %v470 = vld [vmem:[%s261 + $0x500] sm:$0xff]
        %v471 = vld [vmem:[%s261 + $0x508] sm:$0xff]
        %v472 = vld [vmem:[%s261 + $0x510] sm:$0xff]
        %v473 = vld [vmem:[%s261 + $0x518] sm:$0xff]
        %v474 = vld [vmem:[%s261 + $0x520] sm:$0xff]
        %v475 = vld [vmem:[%s261 + $0x528] sm:$0xff]
        %v476 = vld [vmem:[%s261 + $0x530] sm:$0xff]
        %v477 = vld [vmem:[%s261 + $0x538] sm:$0xff]
        %v478 = vld [vmem:[%s261 + $0x540] sm:$0xff]
        %v479 = vld [vmem:[%s261 + $0x548] sm:$0xff]
        %v480 = vld [vmem:[%s261 + $0x550] sm:$0xff]
        %v481 = vld [vmem:[%s261 + $0x558] sm:$0xff]
        %v482 = vld [vmem:[%s261 + $0x560] sm:$0xff]
        %v483 = vld [vmem:[%s261 + $0x568] sm:$0xff]
        %v484 = vld [vmem:[%s261 + $0x570] sm:$0xff]
        %v485 = vld [vmem:[%s261 + $0x578] sm:$0xff]
        %v486 = vld [vmem:[%s261 + $0x580] sm:$0xff]
        %v487 = vld [vmem:[%s261 + $0x588] sm:$0xff]
        %v488 = vld [vmem:[%s261 + $0x590] sm:$0xff]
        %v489 = vld [vmem:[%s261 + $0x598] sm:$0xff]
        %v490 = vld [vmem:[%s261 + $0x5a0] sm:$0xff]
        %v491 = vld [vmem:[%s261 + $0x5a8] sm:$0xff]
        %v492 = vld [vmem:[%s261 + $0x5b0] sm:$0xff]
        %v493 = vld [vmem:[%s261 + $0x5b8] sm:$0xff]
        %v494 = vld [vmem:[%s261 + $0x5c0] sm:$0xff]
        %v495 = vld [vmem:[%s261 + $0x5c8] sm:$0xff]
        %v496 = vld [vmem:[%s261 + $0x5d0] sm:$0xff]
        %v497 = vld [vmem:[%s261 + $0x5d8] sm:$0xff]
        %v498 = vld [vmem:[%s261 + $0x5e0] sm:$0xff]
        %v499 = vld [vmem:[%s261 + $0x5e8] sm:$0xff]
        %v500 = vld [vmem:[%s261 + $0x5f0] sm:$0xff]
        %v501 = vld [vmem:[%s261 + $0x5f8] sm:$0xff]
        %v502 = vld [vmem:[%s261 + $0x600] sm:$0xff]
        %v503 = vld [vmem:[%s261 + $0x608] sm:$0xff]
        %v504 = vld [vmem:[%s261 + $0x610] sm:$0xff]
        %v505 = vld [vmem:[%s261 + $0x618] sm:$0xff]
        %v506 = vld [vmem:[%s261 + $0x620] sm:$0xff]
        %v507 = vld [vmem:[%s261 + $0x628] sm:$0xff]
        %v508 = vld [vmem:[%s261 + $0x630] sm:$0xff]
        %v509 = vld [vmem:[%s261 + $0x638] sm:$0xff]
        %v510 = vld [vmem:[#allocation7] sm:$0xff]
        %v511 = vld [vmem:[#allocation7 + $0x8] sm:$0xff]
        %v512 = vld [vmem:[#allocation7 + $0x10] sm:$0xff]
        %v513 = vld [vmem:[#allocation7 + $0x18] sm:$0xff]
        %v514 = vld [vmem:[#allocation7 + $0x20] sm:$0xff]
        %v515 = vld [vmem:[#allocation7 + $0x28] sm:$0xff]
        %v516 = vld [vmem:[#allocation7 + $0x30] sm:$0xff]
        %v517 = vld [vmem:[#allocation7 + $0x38] sm:$0xff]
        %v518 = vld [vmem:[#allocation7 + $0x40] sm:$0xff]
        %v519 = vld [vmem:[#allocation7 + $0x48] sm:$0xff]
        %v520 = vld [vmem:[#allocation7 + $0x50] sm:$0xff]
        %v521 = vld [vmem:[#allocation7 + $0x58] sm:$0xff]
        %v522 = vld [vmem:[#allocation7 + $0x60] sm:$0xff]
        %v523 = vld [vmem:[#allocation7 + $0x68] sm:$0xff]
        %v524 = vld [vmem:[#allocation7 + $0x70] sm:$0xff]
        %v525 = vld [vmem:[#allocation7 + $0x78] sm:$0xff]
        %v526 = vld [vmem:[#allocation7 + $0x80] sm:$0xff]
        %v527 = vld [vmem:[#allocation7 + $0x88] sm:$0xff]
        %v528 = vld [vmem:[#allocation7 + $0x90] sm:$0xff]
        %v529 = vld [vmem:[#allocation7 + $0x98] sm:$0xff]
        %v530 = vld [vmem:[#allocation7 + $0xa0] sm:$0xff]
        %v531 = vld [vmem:[#allocation7 + $0xa8] sm:$0xff]
        %v532 = vld [vmem:[#allocation7 + $0xb0] sm:$0xff]
        %v533 = vld [vmem:[#allocation7 + $0xb8] sm:$0xff]
        %v534 = vld [vmem:[#allocation7 + $0xc0] sm:$0xff]
        %v535 = vld [vmem:[#allocation7 + $0xc8] sm:$0xff]
        %v536 = vld [vmem:[#allocation7 + $0xd0] sm:$0xff]
        %v537 = vld [vmem:[#allocation7 + $0xd8] sm:$0xff]
        %v538 = vld [vmem:[#allocation7 + $0xe0] sm:$0xff]
        %v539 = vld [vmem:[#allocation7 + $0xe8] sm:$0xff]
        %v540 = vld [vmem:[#allocation7 + $0xf0] sm:$0xff]
        %v541 = vld [vmem:[#allocation7 + $0xf8] sm:$0xff]
        %v542 = vld [vmem:[#allocation7 + $0x100] sm:$0xff]
        %v543 = vld [vmem:[#allocation7 + $0x108] sm:$0xff]
        %v544 = vld [vmem:[#allocation7 + $0x110] sm:$0xff]
        %v545 = vld [vmem:[#allocation7 + $0x118] sm:$0xff]
        %v546 = vld [vmem:[#allocation7 + $0x120] sm:$0xff]
        %v547 = vld [vmem:[#allocation7 + $0x128] sm:$0xff]
        %v548 = vld [vmem:[#allocation7 + $0x130] sm:$0xff]
        %v549 = vld [vmem:[#allocation7 + $0x138] sm:$0xff]
        %v550 = vld [vmem:[#allocation7 + $0x140] sm:$0xff]
        %v551 = vld [vmem:[#allocation7 + $0x148] sm:$0xff]
        %v552 = vld [vmem:[#allocation7 + $0x150] sm:$0xff]
        %v553 = vld [vmem:[#allocation7 + $0x158] sm:$0xff]
        %v554 = vld [vmem:[#allocation7 + $0x160] sm:$0xff]
        %v555 = vld [vmem:[#allocation7 + $0x168] sm:$0xff]
        %v556 = vld [vmem:[#allocation7 + $0x170] sm:$0xff]
        %v557 = vld [vmem:[#allocation7 + $0x178] sm:$0xff]
        %v558 = vld [vmem:[#allocation7 + $0x180] sm:$0xff]
        %v559 = vld [vmem:[#allocation7 + $0x188] sm:$0xff]
        %v560 = vld [vmem:[#allocation7 + $0x190] sm:$0xff]
        %v561 = vld [vmem:[#allocation7 + $0x198] sm:$0xff]
        %v562 = vld [vmem:[#allocation7 + $0x1a0] sm:$0xff]
        %v563 = vld [vmem:[#allocation7 + $0x1a8] sm:$0xff]
        %v564 = vld [vmem:[#allocation7 + $0x1b0] sm:$0xff]
        %v565 = vld [vmem:[#allocation7 + $0x1b8] sm:$0xff]
        %v566 = vld [vmem:[#allocation7 + $0x1c0] sm:$0xff]
        %v567 = vld [vmem:[#allocation7 + $0x1c8] sm:$0xff]
        %v568 = vld [vmem:[#allocation7 + $0x1d0] sm:$0xff]
        %v569 = vld [vmem:[#allocation7 + $0x1d8] sm:$0xff]
        %v570 = vld [vmem:[#allocation7 + $0x1e0] sm:$0xff]
        %v571 = vld [vmem:[#allocation7 + $0x1e8] sm:$0xff]
        %v572 = vld [vmem:[#allocation7 + $0x1f0] sm:$0xff]
        %v573 = vld [vmem:[#allocation7 + $0x1f8] sm:$0xff]
        %v574 = vld [vmem:[#allocation7 + $0x200] sm:$0xff]
        %v575 = vld [vmem:[#allocation7 + $0x208] sm:$0xff]
        %v576 = vld [vmem:[#allocation7 + $0x210] sm:$0xff]
        %v577 = vld [vmem:[#allocation7 + $0x218] sm:$0xff]
        %v578 = vld [vmem:[#allocation7 + $0x220] sm:$0xff]
        %v579 = vld [vmem:[#allocation7 + $0x228] sm:$0xff]
        %v580 = vld [vmem:[#allocation7 + $0x230] sm:$0xff]
        %v581 = vld [vmem:[#allocation7 + $0x238] sm:$0xff]
        %v582 = vld [vmem:[#allocation7 + $0x240] sm:$0xff]
        %v583 = vld [vmem:[#allocation7 + $0x248] sm:$0xff]
        %v584 = vld [vmem:[#allocation7 + $0x250] sm:$0xff]
        %v585 = vld [vmem:[#allocation7 + $0x258] sm:$0xff]
        %v586 = vld [vmem:[#allocation7 + $0x260] sm:$0xff]
        %v587 = vld [vmem:[#allocation7 + $0x268] sm:$0xff]
        %v588 = vld [vmem:[#allocation7 + $0x270] sm:$0xff]
        %v589 = vld [vmem:[#allocation7 + $0x278] sm:$0xff]
        %v590 = vld [vmem:[#allocation7 + $0x280] sm:$0xff]
        %v591 = vld [vmem:[#allocation7 + $0x288] sm:$0xff]
        %v592 = vld [vmem:[#allocation7 + $0x290] sm:$0xff]
        %v593 = vld [vmem:[#allocation7 + $0x298] sm:$0xff]
        %v594 = vld [vmem:[#allocation7 + $0x2a0] sm:$0xff]
        %v595 = vld [vmem:[#allocation7 + $0x2a8] sm:$0xff]
        %v596 = vld [vmem:[#allocation7 + $0x2b0] sm:$0xff]
        %v597 = vld [vmem:[#allocation7 + $0x2b8] sm:$0xff]
        %v598 = vld [vmem:[#allocation7 + $0x2c0] sm:$0xff]
        %v599 = vld [vmem:[#allocation7 + $0x2c8] sm:$0xff]
        %v600 = vld [vmem:[#allocation7 + $0x2d0] sm:$0xff]
        %v601 = vld [vmem:[#allocation7 + $0x2d8] sm:$0xff]
        %v602 = vld [vmem:[#allocation7 + $0x2e0] sm:$0xff]
        %v603 = vld [vmem:[#allocation7 + $0x2e8] sm:$0xff]
        %v604 = vld [vmem:[#allocation7 + $0x2f0] sm:$0xff]
        %v605 = vld [vmem:[#allocation7 + $0x2f8] sm:$0xff]
        %v606 = vld [vmem:[#allocation7 + $0x300] sm:$0xff]
        %v607 = vld [vmem:[#allocation7 + $0x308] sm:$0xff]
        %v608 = vld [vmem:[#allocation7 + $0x310] sm:$0xff]
        %v609 = vld [vmem:[#allocation7 + $0x318] sm:$0xff]
        %v610 = vld [vmem:[#allocation7 + $0x320] sm:$0xff]
        %v611 = vld [vmem:[#allocation7 + $0x328] sm:$0xff]
        %v612 = vld [vmem:[#allocation7 + $0x330] sm:$0xff]
        %v613 = vld [vmem:[#allocation7 + $0x338] sm:$0xff]
        %v614 = vld [vmem:[#allocation7 + $0x340] sm:$0xff]
        %v615 = vld [vmem:[#allocation7 + $0x348] sm:$0xff]
        %v616 = vld [vmem:[#allocation7 + $0x350] sm:$0xff]
        %v617 = vld [vmem:[#allocation7 + $0x358] sm:$0xff]
        %v618 = vld [vmem:[#allocation7 + $0x360] sm:$0xff]
        %v619 = vld [vmem:[#allocation7 + $0x368] sm:$0xff]
        %v620 = vld [vmem:[#allocation7 + $0x370] sm:$0xff]
        %v621 = vld [vmem:[#allocation7 + $0x378] sm:$0xff]
        %v622 = vld [vmem:[#allocation7 + $0x380] sm:$0xff]
        %v623 = vld [vmem:[#allocation7 + $0x388] sm:$0xff]
        %v624 = vld [vmem:[#allocation7 + $0x390] sm:$0xff]
        %v625 = vld [vmem:[#allocation7 + $0x398] sm:$0xff]
        %v626 = vld [vmem:[#allocation7 + $0x3a0] sm:$0xff]
        %v627 = vld [vmem:[#allocation7 + $0x3a8] sm:$0xff]
        %v628 = vld [vmem:[#allocation7 + $0x3b0] sm:$0xff]
        %v629 = vld [vmem:[#allocation7 + $0x3b8] sm:$0xff]
        %v630 = vld [vmem:[#allocation7 + $0x3c0] sm:$0xff]
        %v631 = vld [vmem:[#allocation7 + $0x3c8] sm:$0xff]
        %v632 = vld [vmem:[#allocation7 + $0x3d0] sm:$0xff]
        %v633 = vld [vmem:[#allocation7 + $0x3d8] sm:$0xff]
        %v634 = vld [vmem:[#allocation7 + $0x3e0] sm:$0xff]
        %v635 = vld [vmem:[#allocation7 + $0x3e8] sm:$0xff]
        %v636 = vld [vmem:[#allocation7 + $0x3f0] sm:$0xff]
        %v637 = vld [vmem:[#allocation7 + $0x3f8] sm:$0xff]
        %v638 = vld [vmem:[#allocation7 + $0x400] sm:$0xff]
        %v639 = vld [vmem:[#allocation7 + $0x408] sm:$0xff]
        %v640 = vld [vmem:[#allocation7 + $0x410] sm:$0xff]
        %v641 = vld [vmem:[#allocation7 + $0x418] sm:$0xff]
        %v642 = vld [vmem:[#allocation7 + $0x420] sm:$0xff]
        %v643 = vld [vmem:[#allocation7 + $0x428] sm:$0xff]
        %v644 = vld [vmem:[#allocation7 + $0x430] sm:$0xff]
        %v645 = vld [vmem:[#allocation7 + $0x438] sm:$0xff]
        %v646 = vld [vmem:[#allocation7 + $0x440] sm:$0xff]
        %v647 = vld [vmem:[#allocation7 + $0x448] sm:$0xff]
        %v648 = vld [vmem:[#allocation7 + $0x450] sm:$0xff]
        %v649 = vld [vmem:[#allocation7 + $0x458] sm:$0xff]
        %v650 = vld [vmem:[#allocation7 + $0x460] sm:$0xff]
        %v651 = vld [vmem:[#allocation7 + $0x468] sm:$0xff]
        %v652 = vld [vmem:[#allocation7 + $0x470] sm:$0xff]
        %v653 = vld [vmem:[#allocation7 + $0x478] sm:$0xff]
        %v654 = vld [vmem:[#allocation7 + $0x480] sm:$0xff]
        %v655 = vld [vmem:[#allocation7 + $0x488] sm:$0xff]
        %v656 = vld [vmem:[#allocation7 + $0x490] sm:$0xff]
        %v657 = vld [vmem:[#allocation7 + $0x498] sm:$0xff]
        %v658 = vld [vmem:[#allocation7 + $0x4a0] sm:$0xff]
        %v659 = vld [vmem:[#allocation7 + $0x4a8] sm:$0xff]
        %v660 = vld [vmem:[#allocation7 + $0x4b0] sm:$0xff]
        %v661 = vld [vmem:[#allocation7 + $0x4b8] sm:$0xff]
        %v662 = vld [vmem:[#allocation7 + $0x4c0] sm:$0xff]
        %v663 = vld [vmem:[#allocation7 + $0x4c8] sm:$0xff]
        %v664 = vld [vmem:[#allocation7 + $0x4d0] sm:$0xff]
        %v665 = vld [vmem:[#allocation7 + $0x4d8] sm:$0xff]
        %v666 = vld [vmem:[#allocation7 + $0x4e0] sm:$0xff]
        %v667 = vld [vmem:[#allocation7 + $0x4e8] sm:$0xff]
        %v668 = vld [vmem:[#allocation7 + $0x4f0] sm:$0xff]
        %v669 = vld [vmem:[#allocation7 + $0x4f8] sm:$0xff]
        %v670 = vld [vmem:[#allocation7 + $0x500] sm:$0xff]
        %v671 = vld [vmem:[#allocation7 + $0x508] sm:$0xff]
        %v672 = vld [vmem:[#allocation7 + $0x510] sm:$0xff]
        %v673 = vld [vmem:[#allocation7 + $0x518] sm:$0xff]
        %v674 = vld [vmem:[#allocation7 + $0x520] sm:$0xff]
        %v675 = vld [vmem:[#allocation7 + $0x528] sm:$0xff]
        %v676 = vld [vmem:[#allocation7 + $0x530] sm:$0xff]
        %v677 = vld [vmem:[#allocation7 + $0x538] sm:$0xff]
        %v678 = vld [vmem:[#allocation7 + $0x540] sm:$0xff]
        %v679 = vld [vmem:[#allocation7 + $0x548] sm:$0xff]
        %v680 = vld [vmem:[#allocation7 + $0x550] sm:$0xff]
        %v681 = vld [vmem:[#allocation7 + $0x558] sm:$0xff]
        %v682 = vld [vmem:[#allocation7 + $0x560] sm:$0xff]
        %v683 = vld [vmem:[#allocation7 + $0x568] sm:$0xff]
        %v684 = vld [vmem:[#allocation7 + $0x570] sm:$0xff]
        %v685 = vld [vmem:[#allocation7 + $0x578] sm:$0xff]
        %v686 = vld [vmem:[#allocation7 + $0x580] sm:$0xff]
        %v687 = vld [vmem:[#allocation7 + $0x588] sm:$0xff]
        %v688 = vld [vmem:[#allocation7 + $0x590] sm:$0xff]
        %v689 = vld [vmem:[#allocation7 + $0x598] sm:$0xff]
        %v690 = vld [vmem:[#allocation7 + $0x5a0] sm:$0xff]
        %v691 = vld [vmem:[#allocation7 + $0x5a8] sm:$0xff]
        %v692 = vld [vmem:[#allocation7 + $0x5b0] sm:$0xff]
        %v693 = vld [vmem:[#allocation7 + $0x5b8] sm:$0xff]
        %v694 = vld [vmem:[#allocation7 + $0x5c0] sm:$0xff]
        %v695 = vld [vmem:[#allocation7 + $0x5c8] sm:$0xff]
        %v696 = vld [vmem:[#allocation7 + $0x5d0] sm:$0xff]
        %v697 = vld [vmem:[#allocation7 + $0x5d8] sm:$0xff]
        %v698 = vld [vmem:[#allocation7 + $0x5e0] sm:$0xff]
        %v699 = vld [vmem:[#allocation7 + $0x5e8] sm:$0xff]
        %v700 = vld [vmem:[#allocation7 + $0x5f0] sm:$0xff]
        %v701 = vld [vmem:[#allocation7 + $0x5f8] sm:$0xff]
        %v702 = vld [vmem:[#allocation7 + $0x600] sm:$0xff]
        %v703 = vld [vmem:[#allocation7 + $0x608] sm:$0xff]
        %v704 = vld [vmem:[#allocation7 + $0x610] sm:$0xff]
        %v705 = vld [vmem:[#allocation7 + $0x618] sm:$0xff]
        %v706 = vld [vmem:[#allocation7 + $0x620] sm:$0xff]
        %v707 = vld [vmem:[#allocation7 + $0x628] sm:$0xff]
        %v708 = vld [vmem:[#allocation7 + $0x630] sm:$0xff]
        %v709 = vld [vmem:[#allocation7 + $0x638] sm:$0xff]
        %v710 = vmul.f32 %v310, %v510
        %v711 = vmul.f32 %v311, %v511
        %v712 = vmul.f32 %v312, %v512
        %v713 = vmul.f32 %v313, %v513
        %v714 = vmul.f32 %v314, %v514
        %v715 = vmul.f32 %v315, %v515
        %v716 = vmul.f32 %v316, %v516
        %v717 = vmul.f32 %v317, %v517
        %v718 = vmul.f32 %v318, %v518
        %v719 = vmul.f32 %v319, %v519
        %v720 = vmul.f32 %v320, %v520
        %v721 = vmul.f32 %v321, %v521
        %v722 = vmul.f32 %v322, %v522
        %v723 = vmul.f32 %v323, %v523
        %v724 = vmul.f32 %v324, %v524
        %v725 = vmul.f32 %v325, %v525
        %v726 = vmul.f32 %v326, %v526
        %v727 = vmul.f32 %v327, %v527
        %v728 = vmul.f32 %v328, %v528
        %v729 = vmul.f32 %v329, %v529
        %v730 = vmul.f32 %v330, %v530
        %v731 = vmul.f32 %v331, %v531
        %v732 = vmul.f32 %v332, %v532
        %v733 = vmul.f32 %v333, %v533
        %v734 = vmul.f32 %v334, %v534
        %v735 = vmul.f32 %v335, %v535
        %v736 = vmul.f32 %v336, %v536
        %v737 = vmul.f32 %v337, %v537
        %v738 = vmul.f32 %v338, %v538
        %v739 = vmul.f32 %v339, %v539
        %v740 = vmul.f32 %v340, %v540
        %v741 = vmul.f32 %v341, %v541
        %v742 = vmul.f32 %v342, %v542
        %v743 = vmul.f32 %v343, %v543
        %v744 = vmul.f32 %v344, %v544
        %v745 = vmul.f32 %v345, %v545
        %v746 = vmul.f32 %v346, %v546
        %v747 = vmul.f32 %v347, %v547
        %v748 = vmul.f32 %v348, %v548
        %v749 = vmul.f32 %v349, %v549
        %v750 = vmul.f32 %v350, %v550
        %v751 = vmul.f32 %v351, %v551
        %v752 = vmul.f32 %v352, %v552
        %v753 = vmul.f32 %v353, %v553
        %v754 = vmul.f32 %v354, %v554
        %v755 = vmul.f32 %v355, %v555
        %v756 = vmul.f32 %v356, %v556
        %v757 = vmul.f32 %v357, %v557
        %v758 = vmul.f32 %v358, %v558
        %v759 = vmul.f32 %v359, %v559
        %v760 = vmul.f32 %v360, %v560
        %v761 = vmul.f32 %v361, %v561
        %v762 = vmul.f32 %v362, %v562
        %v763 = vmul.f32 %v363, %v563
        %v764 = vmul.f32 %v364, %v564
        %v765 = vmul.f32 %v365, %v565
        %v766 = vmul.f32 %v366, %v566
        %v767 = vmul.f32 %v367, %v567
        %v768 = vmul.f32 %v368, %v568
        %v769 = vmul.f32 %v369, %v569
        %v770 = vmul.f32 %v370, %v570
        %v771 = vmul.f32 %v371, %v571
        %v772 = vmul.f32 %v372, %v572
        %v773 = vmul.f32 %v373, %v573
        %v774 = vmul.f32 %v374, %v574
        %v775 = vmul.f32 %v375, %v575
        %v776 = vmul.f32 %v376, %v576
        %v777 = vmul.f32 %v377, %v577
        %v778 = vmul.f32 %v378, %v578
        %v779 = vmul.f32 %v379, %v579
        %v780 = vmul.f32 %v380, %v580
        %v781 = vmul.f32 %v381, %v581
        %v782 = vmul.f32 %v382, %v582
        %v783 = vmul.f32 %v383, %v583
        %v784 = vmul.f32 %v384, %v584
        %v785 = vmul.f32 %v385, %v585
        %v786 = vmul.f32 %v386, %v586
        %v787 = vmul.f32 %v387, %v587
        %v788 = vmul.f32 %v388, %v588
        %v789 = vmul.f32 %v389, %v589
        %v790 = vmul.f32 %v390, %v590
        %v791 = vmul.f32 %v391, %v591
        %v792 = vmul.f32 %v392, %v592
        %v793 = vmul.f32 %v393, %v593
        %v794 = vmul.f32 %v394, %v594
        %v795 = vmul.f32 %v395, %v595
        %v796 = vmul.f32 %v396, %v596
        %v797 = vmul.f32 %v397, %v597
        %v798 = vmul.f32 %v398, %v598
        %v799 = vmul.f32 %v399, %v599
        %v800 = vmul.f32 %v400, %v600
        %v801 = vmul.f32 %v401, %v601
        %v802 = vmul.f32 %v402, %v602
        %v803 = vmul.f32 %v403, %v603
        %v804 = vmul.f32 %v404, %v604
        %v805 = vmul.f32 %v405, %v605
        %v806 = vmul.f32 %v406, %v606
        %v807 = vmul.f32 %v407, %v607
        %v808 = vmul.f32 %v408, %v608
        %v809 = vmul.f32 %v409, %v609
        %v810 = vmul.f32 %v410, %v610
        %v811 = vmul.f32 %v411, %v611
        %v812 = vmul.f32 %v412, %v612
        %v813 = vmul.f32 %v413, %v613
        %v814 = vmul.f32 %v414, %v614
        %v815 = vmul.f32 %v415, %v615
        %v816 = vmul.f32 %v416, %v616
        %v817 = vmul.f32 %v417, %v617
        %v818 = vmul.f32 %v418, %v618
        %v819 = vmul.f32 %v419, %v619
        %v820 = vmul.f32 %v420, %v620
        %v821 = vmul.f32 %v421, %v621
        %v822 = vmul.f32 %v422, %v622
        %v823 = vmul.f32 %v423, %v623
        %v824 = vmul.f32 %v424, %v624
        %v825 = vmul.f32 %v425, %v625
        %v826 = vmul.f32 %v426, %v626
        %v827 = vmul.f32 %v427, %v627
        %v828 = vmul.f32 %v428, %v628
        %v829 = vmul.f32 %v429, %v629
        %v830 = vmul.f32 %v430, %v630
        %v831 = vmul.f32 %v431, %v631
        %v832 = vmul.f32 %v432, %v632
        %v833 = vmul.f32 %v433, %v633
        %v834 = vmul.f32 %v434, %v634
        %v835 = vmul.f32 %v435, %v635
        %v836 = vmul.f32 %v436, %v636
        %v837 = vmul.f32 %v437, %v637
        %v838 = vmul.f32 %v438, %v638
        %v839 = vmul.f32 %v439, %v639
        %v840 = vmul.f32 %v440, %v640
        %v841 = vmul.f32 %v441, %v641
        %v842 = vmul.f32 %v442, %v642
        %v843 = vmul.f32 %v443, %v643
        %v844 = vmul.f32 %v444, %v644
        %v845 = vmul.f32 %v445, %v645
        %v846 = vmul.f32 %v446, %v646
        %v847 = vmul.f32 %v447, %v647
        %v848 = vmul.f32 %v448, %v648
        %v849 = vmul.f32 %v449, %v649
        %v850 = vmul.f32 %v450, %v650
        %v851 = vmul.f32 %v451, %v651
        %v852 = vmul.f32 %v452, %v652
        %v853 = vmul.f32 %v453, %v653
        %v854 = vmul.f32 %v454, %v654
        %v855 = vmul.f32 %v455, %v655
        %v856 = vmul.f32 %v456, %v656
        %v857 = vmul.f32 %v457, %v657
        %v858 = vmul.f32 %v458, %v658
        %v859 = vmul.f32 %v459, %v659
        %v860 = vmul.f32 %v460, %v660
        %v861 = vmul.f32 %v461, %v661
        %v862 = vmul.f32 %v462, %v662
        %v863 = vmul.f32 %v463, %v663
        %v864 = vmul.f32 %v464, %v664
        %v865 = vmul.f32 %v465, %v665
        %v866 = vmul.f32 %v466, %v666
        %v867 = vmul.f32 %v467, %v667
        %v868 = vmul.f32 %v468, %v668
        %v869 = vmul.f32 %v469, %v669
        %v870 = vmul.f32 %v470, %v670
        %v871 = vmul.f32 %v471, %v671
        %v872 = vmul.f32 %v472, %v672
        %v873 = vmul.f32 %v473, %v673
        %v874 = vmul.f32 %v474, %v674
        %v875 = vmul.f32 %v475, %v675
        %v876 = vmul.f32 %v476, %v676
        %v877 = vmul.f32 %v477, %v677
        %v878 = vmul.f32 %v478, %v678
        %v879 = vmul.f32 %v479, %v679
        %v880 = vmul.f32 %v480, %v680
        %v881 = vmul.f32 %v481, %v681
        %v882 = vmul.f32 %v482, %v682
        %v883 = vmul.f32 %v483, %v683
        %v884 = vmul.f32 %v484, %v684
        %v885 = vmul.f32 %v485, %v685
        %v886 = vmul.f32 %v486, %v686
        %v887 = vmul.f32 %v487, %v687
        %v888 = vmul.f32 %v488, %v688
        %v889 = vmul.f32 %v489, %v689
        %v890 = vmul.f32 %v490, %v690
        %v891 = vmul.f32 %v491, %v691
        %v892 = vmul.f32 %v492, %v692
        %v893 = vmul.f32 %v493, %v693
        %v894 = vmul.f32 %v494, %v694
        %v895 = vmul.f32 %v495, %v695
        %v896 = vmul.f32 %v496, %v696
        %v897 = vmul.f32 %v497, %v697
        %v898 = vmul.f32 %v498, %v698
        %v899 = vmul.f32 %v499, %v699
        %v900 = vmul.f32 %v500, %v700
        %v901 = vmul.f32 %v501, %v701
        %v902 = vmul.f32 %v502, %v702
        %v903 = vmul.f32 %v503, %v703
        %v904 = vmul.f32 %v504, %v704
        %v905 = vmul.f32 %v505, %v705
        %v906 = vmul.f32 %v506, %v706
        %v907 = vmul.f32 %v507, %v707
        %v908 = vmul.f32 %v508, %v708
        %v909 = vmul.f32 %v509, %v709
        %v910 = vadd.f32 %v710, %v711
        %v911 = vadd.f32 %v910, %v712
        %v912 = vadd.f32 %v911, %v713
        %v913 = vadd.f32 %v912, %v714
        %v914 = vadd.f32 %v913, %v715
        %v915 = vadd.f32 %v914, %v716
        %v916 = vadd.f32 %v915, %v717
        %v917 = vadd.f32 %v916, %v718
        %v918 = vadd.f32 %v917, %v719
        %v919 = vadd.f32 %v918, %v720
        %v920 = vadd.f32 %v919, %v721
        %v921 = vadd.f32 %v920, %v722
        %v922 = vadd.f32 %v921, %v723
        %v923 = vadd.f32 %v922, %v724
        %v924 = vadd.f32 %v923, %v725
        %v925 = vadd.f32 %v924, %v726
        %v926 = vadd.f32 %v925, %v727
        %v927 = vadd.f32 %v926, %v728
        %v928 = vadd.f32 %v927, %v729
        %v929 = vadd.f32 %v928, %v730
        %v930 = vadd.f32 %v929, %v731
        %v931 = vadd.f32 %v930, %v732
        %v932 = vadd.f32 %v931, %v733
        %vm933 = vcmask 523264
        %v934 = vsel %vm933, %v734, 0.0
        %v935 = vadd.f32 %v932, %v934
        %936 = vadd.xlane.f32.xlu0 %v935
        %v937 = vpop.xlane.xlu0 %936
        %v938 = vadd.f32 %v735, %v736
        %v939 = vadd.f32 %v938, %v737
        %v940 = vadd.f32 %v939, %v738
        %v941 = vadd.f32 %v940, %v739
        %v942 = vadd.f32 %v941, %v740
        %v943 = vadd.f32 %v942, %v741
        %v944 = vadd.f32 %v943, %v742
        %v945 = vadd.f32 %v944, %v743
        %v946 = vadd.f32 %v945, %v744
        %v947 = vadd.f32 %v946, %v745
        %v948 = vadd.f32 %v947, %v746
        %v949 = vadd.f32 %v948, %v747
        %v950 = vadd.f32 %v949, %v748
        %v951 = vadd.f32 %v950, %v749
        %v952 = vadd.f32 %v951, %v750
        %v953 = vadd.f32 %v952, %v751
        %v954 = vadd.f32 %v953, %v752
        %v955 = vadd.f32 %v954, %v753
        %v956 = vadd.f32 %v955, %v754
        %v957 = vadd.f32 %v956, %v755
        %v958 = vadd.f32 %v957, %v756
        %v959 = vadd.f32 %v958, %v757
        %v960 = vadd.f32 %v959, %v758
        %v961 = vsel %vm933, %v759, 0.0
        %v962 = vadd.f32 %v960, %v961
        %963 = vadd.xlane.f32.xlu0 %v962
        %v964 = vpop.xlane.xlu0 %963
        %v965 = vadd.f32 %v760, %v761
        %v966 = vadd.f32 %v965, %v762
        %v967 = vadd.f32 %v966, %v763
        %v968 = vadd.f32 %v967, %v764
        %v969 = vadd.f32 %v968, %v765
        %v970 = vadd.f32 %v969, %v766
        %v971 = vadd.f32 %v970, %v767
        %v972 = vadd.f32 %v971, %v768
        %v973 = vadd.f32 %v972, %v769
        %v974 = vadd.f32 %v973, %v770
        %v975 = vadd.f32 %v974, %v771
        %v976 = vadd.f32 %v975, %v772
        %v977 = vadd.f32 %v976, %v773
        %v978 = vadd.f32 %v977, %v774
        %v979 = vadd.f32 %v978, %v775
        %v980 = vadd.f32 %v979, %v776
        %v981 = vadd.f32 %v980, %v777
        %v982 = vadd.f32 %v981, %v778
        %v983 = vadd.f32 %v982, %v779
        %v984 = vadd.f32 %v983, %v780
        %v985 = vadd.f32 %v984, %v781
        %v986 = vadd.f32 %v985, %v782
        %v987 = vadd.f32 %v986, %v783
        %v988 = vsel %vm933, %v784, 0.0
        %v989 = vadd.f32 %v987, %v988
        %990 = vadd.xlane.f32.xlu0 %v989
        %v991 = vpop.xlane.xlu0 %990
        %v992 = vadd.f32 %v785, %v786
        %v993 = vadd.f32 %v992, %v787
        %v994 = vadd.f32 %v993, %v788
        %v995 = vadd.f32 %v994, %v789
        %v996 = vadd.f32 %v995, %v790
        %v997 = vadd.f32 %v996, %v791
        %v998 = vadd.f32 %v997, %v792
        %v999 = vadd.f32 %v998, %v793
        %v1000 = vadd.f32 %v999, %v794
        %v1001 = vadd.f32 %v1000, %v795
        %v1002 = vadd.f32 %v1001, %v796
        %v1003 = vadd.f32 %v1002, %v797
        %v1004 = vadd.f32 %v1003, %v798
        %v1005 = vadd.f32 %v1004, %v799
        %v1006 = vadd.f32 %v1005, %v800
        %v1007 = vadd.f32 %v1006, %v801
        %v1008 = vadd.f32 %v1007, %v802
        %v1009 = vadd.f32 %v1008, %v803
        %v1010 = vadd.f32 %v1009, %v804
        %v1011 = vadd.f32 %v1010, %v805
        %v1012 = vadd.f32 %v1011, %v806
        %v1013 = vadd.f32 %v1012, %v807
        %v1014 = vadd.f32 %v1013, %v808
        %v1015 = vsel %vm933, %v809, 0.0
        %v1016 = vadd.f32 %v1014, %v1015
        %1017 = vadd.xlane.f32.xlu0 %v1016
        %v1018 = vpop.xlane.xlu0 %1017
        %v1019 = vadd.f32 %v810, %v811
        %v1020 = vadd.f32 %v1019, %v812
        %v1021 = vadd.f32 %v1020, %v813
        %v1022 = vadd.f32 %v1021, %v814
        %v1023 = vadd.f32 %v1022, %v815
        %v1024 = vadd.f32 %v1023, %v816
        %v1025 = vadd.f32 %v1024, %v817
        %v1026 = vadd.f32 %v1025, %v818
        %v1027 = vadd.f32 %v1026, %v819
        %v1028 = vadd.f32 %v1027, %v820
        %v1029 = vadd.f32 %v1028, %v821
        %v1030 = vadd.f32 %v1029, %v822
        %v1031 = vadd.f32 %v1030, %v823
        %v1032 = vadd.f32 %v1031, %v824
        %v1033 = vadd.f32 %v1032, %v825
        %v1034 = vadd.f32 %v1033, %v826
        %v1035 = vadd.f32 %v1034, %v827
        %v1036 = vadd.f32 %v1035, %v828
        %v1037 = vadd.f32 %v1036, %v829
        %v1038 = vadd.f32 %v1037, %v830
        %v1039 = vadd.f32 %v1038, %v831
        %v1040 = vadd.f32 %v1039, %v832
        %v1041 = vadd.f32 %v1040, %v833
        %v1042 = vsel %vm933, %v834, 0.0
        %v1043 = vadd.f32 %v1041, %v1042
        %1044 = vadd.xlane.f32.xlu0 %v1043
        %v1045 = vpop.xlane.xlu0 %1044
        %v1046 = vadd.f32 %v835, %v836
        %v1047 = vadd.f32 %v1046, %v837
        %v1048 = vadd.f32 %v1047, %v838
        %v1049 = vadd.f32 %v1048, %v839
        %v1050 = vadd.f32 %v1049, %v840
        %v1051 = vadd.f32 %v1050, %v841
        %v1052 = vadd.f32 %v1051, %v842
        %v1053 = vadd.f32 %v1052, %v843
        %v1054 = vadd.f32 %v1053, %v844
        %v1055 = vadd.f32 %v1054, %v845
        %v1056 = vadd.f32 %v1055, %v846
        %v1057 = vadd.f32 %v1056, %v847
        %v1058 = vadd.f32 %v1057, %v848
        %v1059 = vadd.f32 %v1058, %v849
        %v1060 = vadd.f32 %v1059, %v850
        %v1061 = vadd.f32 %v1060, %v851
        %v1062 = vadd.f32 %v1061, %v852
        %v1063 = vadd.f32 %v1062, %v853
        %v1064 = vadd.f32 %v1063, %v854
        %v1065 = vadd.f32 %v1064, %v855
        %v1066 = vadd.f32 %v1065, %v856
        %v1067 = vadd.f32 %v1066, %v857
        %v1068 = vadd.f32 %v1067, %v858
        %v1069 = vsel %vm933, %v859, 0.0
        %v1070 = vadd.f32 %v1068, %v1069
        %1071 = vadd.xlane.f32.xlu0 %v1070
        %v1072 = vpop.xlane.xlu0 %1071
        %v1073 = vadd.f32 %v860, %v861
        %v1074 = vadd.f32 %v1073, %v862
        %v1075 = vadd.f32 %v1074, %v863
        %v1076 = vadd.f32 %v1075, %v864
        %v1077 = vadd.f32 %v1076, %v865
        %v1078 = vadd.f32 %v1077, %v866
        %v1079 = vadd.f32 %v1078, %v867
        %v1080 = vadd.f32 %v1079, %v868
        %v1081 = vadd.f32 %v1080, %v869
        %v1082 = vadd.f32 %v1081, %v870
        %v1083 = vadd.f32 %v1082, %v871
        %v1084 = vadd.f32 %v1083, %v872
        %v1085 = vadd.f32 %v1084, %v873
        %v1086 = vadd.f32 %v1085, %v874
        %v1087 = vadd.f32 %v1086, %v875
        %v1088 = vadd.f32 %v1087, %v876
        %v1089 = vadd.f32 %v1088, %v877
        %v1090 = vadd.f32 %v1089, %v878
        %v1091 = vadd.f32 %v1090, %v879
        %v1092 = vadd.f32 %v1091, %v880
        %v1093 = vadd.f32 %v1092, %v881
        %v1094 = vadd.f32 %v1093, %v882
        %v1095 = vadd.f32 %v1094, %v883
        %v1096 = vsel %vm933, %v884, 0.0
        %v1097 = vadd.f32 %v1095, %v1096
        %1098 = vadd.xlane.f32.xlu0 %v1097
        %v1099 = vpop.xlane.xlu0 %1098
        %v1100 = vadd.f32 %v885, %v886
        %v1101 = vadd.f32 %v1100, %v887
        %v1102 = vadd.f32 %v1101, %v888
        %v1103 = vadd.f32 %v1102, %v889
        %v1104 = vadd.f32 %v1103, %v890
        %v1105 = vadd.f32 %v1104, %v891
        %v1106 = vadd.f32 %v1105, %v892
        %v1107 = vadd.f32 %v1106, %v893
        %v1108 = vadd.f32 %v1107, %v894
        %v1109 = vadd.f32 %v1108, %v895
        %v1110 = vadd.f32 %v1109, %v896
        %v1111 = vadd.f32 %v1110, %v897
        %v1112 = vadd.f32 %v1111, %v898
        %v1113 = vadd.f32 %v1112, %v899
        %v1114 = vadd.f32 %v1113, %v900
        %v1115 = vadd.f32 %v1114, %v901
        %v1116 = vadd.f32 %v1115, %v902
        %v1117 = vadd.f32 %v1116, %v903
        %v1118 = vadd.f32 %v1117, %v904
        %v1119 = vadd.f32 %v1118, %v905
        %v1120 = vadd.f32 %v1119, %v906
        %v1121 = vadd.f32 %v1120, %v907
        %v1122 = vadd.f32 %v1121, %v908
        %v1123 = vsel %vm933, %v909, 0.0
        %v1124 = vadd.f32 %v1122, %v1123
        %1125 = vadd.xlane.f32.xlu0 %v1124
        %v1126 = vpop.xlane.xlu0 %1125
        %v1127 = vld [vmem:[%s3] sm:$0xff]
        %v1128 = vld [vmem:[%s3 + $0x8] sm:$0xff]
        %v1129 = vld [vmem:[%s3 + $0x10] sm:$0xff]
        %v1130 = vld [vmem:[%s3 + $0x18] sm:$0xff]
        %v1131 = vld [vmem:[%s3 + $0x20] sm:$0xff]
        %v1132 = vld [vmem:[%s3 + $0x28] sm:$0xff]
        %v1133 = vld [vmem:[%s3 + $0x30] sm:$0xff]
        %v1134 = vld [vmem:[%s3 + $0x38] sm:$0xff]
        %v1143 = vlaneseq
        %v1144 = vand.u32 %v1143, 127
        %v1145 = vlaneseq
        %v1146 = vshrl.u32 %v1145, 7
        %v1147 = vsub.s32 %v1144, %v1146
        %v1148 = vrot.slane %v937, %v1147
        %v1149 = vadd.s32 %v1144, 4294967288
        %v1150 = vlaneseq
        %v1151 = vshrl.u32 %v1150, 7
        %v1152 = vsub.s32 %v1149, %v1151
        %v1153 = vrot.slane %v964, %v1152
        %vm1154 = vcmask 130112
        %v1155 = vsel %vm1154, %v1153, %v1148
        %v1156 = vadd.s32 %v1144, 4294967280
        %v1157 = vlaneseq
        %v1158 = vshrl.u32 %v1157, 7
        %v1159 = vsub.s32 %v1156, %v1158
        %v1160 = vrot.slane %v991, %v1159
        %vm1161 = vcmask 195712
        %v1162 = vsel %vm1161, %v1160, %v1155
        %v1163 = vadd.s32 %v1144, 4294967272
        %v1164 = vlaneseq
        %v1165 = vshrl.u32 %v1164, 7
        %v1166 = vsub.s32 %v1163, %v1165
        %v1167 = vrot.slane %v1018, %v1166
        %vm1168 = vcmask 261312
        %v1169 = vsel %vm1168, %v1167, %v1162
        %v1170 = vadd.s32 %v1144, 4294967264
        %v1171 = vlaneseq
        %v1172 = vshrl.u32 %v1171, 7
        %v1173 = vsub.s32 %v1170, %v1172
        %v1174 = vrot.slane %v1045, %v1173
        %vm1175 = vcmask 326912
        %v1176 = vsel %vm1175, %v1174, %v1169
        %v1177 = vadd.s32 %v1144, 4294967256
        %v1178 = vlaneseq
        %v1179 = vshrl.u32 %v1178, 7
        %v1180 = vsub.s32 %v1177, %v1179
        %v1181 = vrot.slane %v1072, %v1180
        %vm1182 = vcmask 392512
        %v1183 = vsel %vm1182, %v1181, %v1176
        %v1184 = vadd.s32 %v1144, 4294967248
        %v1185 = vlaneseq
        %v1186 = vshrl.u32 %v1185, 7
        %v1187 = vsub.s32 %v1184, %v1186
        %v1188 = vrot.slane %v1099, %v1187
        %vm1189 = vcmask 458112
        %v1190 = vsel %vm1189, %v1188, %v1183
        %v1191 = vadd.s32 %v1144, 4294967240
        %v1192 = vlaneseq
        %v1193 = vshrl.u32 %v1192, 7
        %v1194 = vsub.s32 %v1191, %v1193
        %v1195 = vrot.slane %v1126, %v1194
        %vm1196 = vcmask 523712
        %v1197 = vsel %vm1196, %v1195, %v1190
        %v1198 = vsel %vm933, %v1197, 0
        %1200 = vmatprep.subr.mxu0 0.0
        %1201 = vmatpush1.msra.mxu0 %v1127
        %1202 = vmatprep.subr.mxu0 0.0
        %1203 = vmatpush1.msra.mxu0 %v1128
        %1204 = vmatprep.subr.mxu0 0.0
        %1205 = vmatpush1.msra.mxu0 %v1129
        %1206 = vmatprep.subr.mxu0 0.0
        %1207 = vmatpush1.msra.mxu0 %v1130
        %1208 = vmatprep.subr.mxu0 0.0
        %1209 = vmatpush1.msra.mxu0 %v1131
        %1210 = vmatprep.subr.mxu0 0.0
        %1211 = vmatpush1.msra.mxu0 %v1132
        %1212 = vmatprep.subr.mxu0 0.0
        %1213 = vmatpush1.msra.mxu0 %v1133
        %1214 = vmatprep.subr.mxu0 0.0
        %1215 = vmatpush1.msra.mxu0 %v1134
        %1216 = vmatprep.subr.mxu0 0.0
        %1217 = vmatpush1.msra.mxu0 0.0
        %1218 = vmatprep.subr.mxu0 0.0
        %1219 = vmatpush1.msra.mxu0 0.0
        %1220 = vmatprep.subr.mxu0 0.0
        %1221 = vmatpush1.msra.mxu0 0.0
        %1222 = vmatprep.subr.mxu0 0.0
        %1223 = vmatpush1.msra.mxu0 0.0
        %1224 = vmatprep.subr.mxu0 0.0
        %1225 = vmatpush1.msra.mxu0 0.0
        %1226 = vmatprep.subr.mxu0 0.0
        %1227 = vmatpush1.msra.mxu0 0.0
        %1228 = vmatprep.subr.mxu0 0.0
        %1229 = vmatpush1.msra.mxu0 0.0
        %1230 = vmatprep.subr.mxu0 0.0
        %1231 = vmatpush1.msra.mxu0 0.0
        %1232 = vmatprep.subr.mxu0 0.0
        %1233 = vmatpush1.msra.mxu0 0.0
        %1234 = vmatprep.subr.mxu0 0.0
        %1235 = vmatpush1.msra.mxu0 0.0
        %1236 = vmatprep.subr.mxu0 0.0
        %1237 = vmatpush1.msra.mxu0 0.0
        %1238 = vmatprep.subr.mxu0 0.0
        %1239 = vmatpush1.msra.mxu0 0.0
        %1240 = vmatprep.subr.mxu0 0.0
        %1241 = vmatpush1.msra.mxu0 0.0
        %1242 = vmatprep.subr.mxu0 0.0
        %1243 = vmatpush1.msra.mxu0 0.0
        %1244 = vmatprep.subr.mxu0 0.0
        %1245 = vmatpush1.msra.mxu0 0.0
        %1246 = vmatprep.subr.mxu0 0.0
        %1247 = vmatpush1.msra.mxu0 0.0
        %1248 = vmatprep.subr.mxu0 0.0
        %1249 = vmatpush1.msra.mxu0 0.0
        %1250 = vmatprep.subr.mxu0 0.0
        %1251 = vmatpush1.msra.mxu0 0.0
        %1252 = vmatprep.subr.mxu0 0.0
        %1253 = vmatpush1.msra.mxu0 0.0
        %1254 = vmatprep.subr.mxu0 0.0
        %1255 = vmatpush1.msra.mxu0 0.0
        %1256 = vmatprep.subr.mxu0 0.0
        %1257 = vmatpush1.msra.mxu0 0.0
        %1258 = vmatprep.subr.mxu0 0.0
        %1259 = vmatpush1.msra.mxu0 0.0
        %1260 = vmatprep.subr.mxu0 0.0
        %1261 = vmatpush1.msra.mxu0 0.0
        %1262 = vmatprep.subr.mxu0 0.0
        %1263 = vmatpush1.msra.mxu0 0.0
        %1264 = vmatprep.mubr.f32.mxu0 0.0
        %1265 = vmatmul.mubr.f32.gmra.mrb[0].mxu0 %v1198
        %v1266 = vpop.f32.mrb[0].mxu0
        %v1267 = vadd.f32 0.0, %v1266
        %v1268 = vpop.f32.mrb[0].mxu0
        %1269 = vdwg.mxu0
        %v1270 = vmax.f32 %v1267, 0.0
        %v1271 = vld [vmem:[#allocation8] sm:$0xf]
        %vm1272 = vcmask 31744
        %v1274 = vsel %vm1272, %v1270, 0
        %vm1276 = vcmask 1043456
        %v1278 = vsel %vm1276, %v1271, 0
        %1280 = vmatprep.subr.mxu0 0.0
        %1281 = vmatpush1.msra.mxu0 %v1278
        %1282 = vmatprep.subr.mxu0 0.0
        %1283 = vmatpush1.msra.mxu0 0.0
        %1284 = vmatprep.subr.mxu0 0.0
        %1285 = vmatpush1.msra.mxu0 0.0
        %1286 = vmatprep.subr.mxu0 0.0
        %1287 = vmatpush1.msra.mxu0 0.0
        %1288 = vmatprep.subr.mxu0 0.0
        %1289 = vmatpush1.msra.mxu0 0.0
        %1290 = vmatprep.subr.mxu0 0.0
        %1291 = vmatpush1.msra.mxu0 0.0
        %1292 = vmatprep.subr.mxu0 0.0
        %1293 = vmatpush1.msra.mxu0 0.0
        %1294 = vmatprep.subr.mxu0 0.0
        %1295 = vmatpush1.msra.mxu0 0.0
        %1296 = vmatprep.subr.mxu0 0.0
        %1297 = vmatpush1.msra.mxu0 0.0
        %1298 = vmatprep.subr.mxu0 0.0
        %1299 = vmatpush1.msra.mxu0 0.0
        %1300 = vmatprep.subr.mxu0 0.0
        %1301 = vmatpush1.msra.mxu0 0.0
        %1302 = vmatprep.subr.mxu0 0.0
        %1303 = vmatpush1.msra.mxu0 0.0
        %1304 = vmatprep.subr.mxu0 0.0
        %1305 = vmatpush1.msra.mxu0 0.0
        %1306 = vmatprep.subr.mxu0 0.0
        %1307 = vmatpush1.msra.mxu0 0.0
        %1308 = vmatprep.subr.mxu0 0.0
        %1309 = vmatpush1.msra.mxu0 0.0
        %1310 = vmatprep.subr.mxu0 0.0
        %1311 = vmatpush1.msra.mxu0 0.0
        %1312 = vmatprep.subr.mxu0 0.0
        %1313 = vmatpush1.msra.mxu0 0.0
        %1314 = vmatprep.subr.mxu0 0.0
        %1315 = vmatpush1.msra.mxu0 0.0
        %1316 = vmatprep.subr.mxu0 0.0
        %1317 = vmatpush1.msra.mxu0 0.0
        %1318 = vmatprep.subr.mxu0 0.0
        %1319 = vmatpush1.msra.mxu0 0.0
        %1320 = vmatprep.subr.mxu0 0.0
        %1321 = vmatpush1.msra.mxu0 0.0
        %1322 = vmatprep.subr.mxu0 0.0
        %1323 = vmatpush1.msra.mxu0 0.0
        %1324 = vmatprep.subr.mxu0 0.0
        %1325 = vmatpush1.msra.mxu0 0.0
        %1326 = vmatprep.subr.mxu0 0.0
        %1327 = vmatpush1.msra.mxu0 0.0
        %1328 = vmatprep.subr.mxu0 0.0
        %1329 = vmatpush1.msra.mxu0 0.0
        %1330 = vmatprep.subr.mxu0 0.0
        %1331 = vmatpush1.msra.mxu0 0.0
        %1332 = vmatprep.subr.mxu0 0.0
        %1333 = vmatpush1.msra.mxu0 0.0
        %1334 = vmatprep.subr.mxu0 0.0
        %1335 = vmatpush1.msra.mxu0 0.0
        %1336 = vmatprep.subr.mxu0 0.0
        %1337 = vmatpush1.msra.mxu0 0.0
        %1338 = vmatprep.subr.mxu0 0.0
        %1339 = vmatpush1.msra.mxu0 0.0
        %1340 = vmatprep.subr.mxu0 0.0
        %1341 = vmatpush1.msra.mxu0 0.0
        %1342 = vmatprep.subr.mxu0 0.0
        %1343 = vmatpush1.msra.mxu0 0.0
        %1344 = vmatprep.mubr.f32.mxu0 0.0
        %1345 = vmatmul.mubr.f32.gmra.mrb[0].mxu0 %v1274
        %v1346 = vpop.f32.mrb[0].mxu0
        %v1347 = vadd.f32 0.0, %v1346
        %v1348 = vpop.f32.mrb[0].mxu0
        %1349 = vdwg.mxu0
        %v1350 = vxor.u32 %v1347, 2147483648
        %v1351 = vmul.f32 %v1350, 1.442695
        %v1352 = vpow.pop %v1351
        %v1353 = vadd.f32 %v1352, 1.0
        %v1354 = vrcp.pop %v1353
        %v1355 = vmul.f32 1.0, %v1354
        %v1356 = vlaneseq
        %v1357 = vshrl.u32 %v1356, 7
        %v1358 = vsub.s32 0, %v1357
        %v1359 = vrot.slane %v1355, %v1358
        %1361 = vbcast.lane.b32.xlu0 %v1359, 256
        %v1362 = vpop.permute.xlu0 %1361
        %s1364 = sor.u32 256, 8
        %1365 = vbcast.lane.b32.xlu0 %v1359, %s1364
        %v1366 = vpop.permute.xlu0 %1365
        %s1368 = sor.u32 256, 16
        %1369 = vbcast.lane.b32.xlu0 %v1359, %s1368
        %v1370 = vpop.permute.xlu0 %1369
        %s1372 = sor.u32 256, 24
        %1373 = vbcast.lane.b32.xlu0 %v1359, %s1372
        %v1374 = vpop.permute.xlu0 %1373
        %s1376 = sor.u32 256, 32
        %1377 = vbcast.lane.b32.xlu0 %v1359, %s1376
        %v1378 = vpop.permute.xlu0 %1377
        %s1380 = sor.u32 256, 40
        %1381 = vbcast.lane.b32.xlu0 %v1359, %s1380
        %v1382 = vpop.permute.xlu0 %1381
        %s1384 = sor.u32 256, 48
        %1385 = vbcast.lane.b32.xlu0 %v1359, %s1384
        %v1386 = vpop.permute.xlu0 %1385
        %s1388 = sor.u32 256, 56
        %1389 = vbcast.lane.b32.xlu0 %v1359, %s1388
        %v1390 = vpop.permute.xlu0 %1389
        %v1391 = vmul.f32 %v310, %v1362
        %v1392 = vmul.f32 %v311, %v1362
        %v1393 = vmul.f32 %v312, %v1362
        %v1394 = vmul.f32 %v313, %v1362
        %v1395 = vmul.f32 %v314, %v1362
        %v1396 = vmul.f32 %v315, %v1362
        %v1397 = vmul.f32 %v316, %v1362
        %v1398 = vmul.f32 %v317, %v1362
        %v1399 = vmul.f32 %v318, %v1362
        %v1400 = vmul.f32 %v319, %v1362
        %v1401 = vmul.f32 %v320, %v1362
        %v1402 = vmul.f32 %v321, %v1362
        %v1403 = vmul.f32 %v322, %v1362
        %v1404 = vmul.f32 %v323, %v1362
        %v1405 = vmul.f32 %v324, %v1362
        %v1406 = vmul.f32 %v325, %v1362
        %v1407 = vmul.f32 %v326, %v1362
        %v1408 = vmul.f32 %v327, %v1362
        %v1409 = vmul.f32 %v328, %v1362
        %v1410 = vmul.f32 %v329, %v1362
        %v1411 = vmul.f32 %v330, %v1362
        %v1412 = vmul.f32 %v331, %v1362
        %v1413 = vmul.f32 %v332, %v1362
        %v1414 = vmul.f32 %v333, %v1362
        %v1415 = vmul.f32 %v334, %v1362
        %v1416 = vmul.f32 %v335, %v1366
        %v1417 = vmul.f32 %v336, %v1366
        %v1418 = vmul.f32 %v337, %v1366
        %v1419 = vmul.f32 %v338, %v1366
        %v1420 = vmul.f32 %v339, %v1366
        %v1421 = vmul.f32 %v340, %v1366
        %v1422 = vmul.f32 %v341, %v1366
        %v1423 = vmul.f32 %v342, %v1366
        %v1424 = vmul.f32 %v343, %v1366
        %v1425 = vmul.f32 %v344, %v1366
        %v1426 = vmul.f32 %v345, %v1366
        %v1427 = vmul.f32 %v346, %v1366
        %v1428 = vmul.f32 %v347, %v1366
        %v1429 = vmul.f32 %v348, %v1366
        %v1430 = vmul.f32 %v349, %v1366
        %v1431 = vmul.f32 %v350, %v1366
        %v1432 = vmul.f32 %v351, %v1366
        %v1433 = vmul.f32 %v352, %v1366
        %v1434 = vmul.f32 %v353, %v1366
        %v1435 = vmul.f32 %v354, %v1366
        %v1436 = vmul.f32 %v355, %v1366
        %v1437 = vmul.f32 %v356, %v1366
        %v1438 = vmul.f32 %v357, %v1366
        %v1439 = vmul.f32 %v358, %v1366
        %v1440 = vmul.f32 %v359, %v1366
        %v1441 = vmul.f32 %v360, %v1370
        %v1442 = vmul.f32 %v361, %v1370
        %v1443 = vmul.f32 %v362, %v1370
        %v1444 = vmul.f32 %v363, %v1370
        %v1445 = vmul.f32 %v364, %v1370
        %v1446 = vmul.f32 %v365, %v1370
        %v1447 = vmul.f32 %v366, %v1370
        %v1448 = vmul.f32 %v367, %v1370
        %v1449 = vmul.f32 %v368, %v1370
        %v1450 = vmul.f32 %v369, %v1370
        %v1451 = vmul.f32 %v370, %v1370
        %v1452 = vmul.f32 %v371, %v1370
        %v1453 = vmul.f32 %v372, %v1370
        %v1454 = vmul.f32 %v373, %v1370
        %v1455 = vmul.f32 %v374, %v1370
        %v1456 = vmul.f32 %v375, %v1370
        %v1457 = vmul.f32 %v376, %v1370
        %v1458 = vmul.f32 %v377, %v1370
        %v1459 = vmul.f32 %v378, %v1370
        %v1460 = vmul.f32 %v379, %v1370
        %v1461 = vmul.f32 %v380, %v1370
        %v1462 = vmul.f32 %v381, %v1370
        %v1463 = vmul.f32 %v382, %v1370
        %v1464 = vmul.f32 %v383, %v1370
        %v1465 = vmul.f32 %v384, %v1370
        %v1466 = vmul.f32 %v385, %v1374
        %v1467 = vmul.f32 %v386, %v1374
        %v1468 = vmul.f32 %v387, %v1374
        %v1469 = vmul.f32 %v388, %v1374
        %v1470 = vmul.f32 %v389, %v1374
        %v1471 = vmul.f32 %v390, %v1374
        %v1472 = vmul.f32 %v391, %v1374
        %v1473 = vmul.f32 %v392, %v1374
        %v1474 = vmul.f32 %v393, %v1374
        %v1475 = vmul.f32 %v394, %v1374
        %v1476 = vmul.f32 %v395, %v1374
        %v1477 = vmul.f32 %v396, %v1374
        %v1478 = vmul.f32 %v397, %v1374
        %v1479 = vmul.f32 %v398, %v1374
        %v1480 = vmul.f32 %v399, %v1374
        %v1481 = vmul.f32 %v400, %v1374
        %v1482 = vmul.f32 %v401, %v1374
        %v1483 = vmul.f32 %v402, %v1374
        %v1484 = vmul.f32 %v403, %v1374
        %v1485 = vmul.f32 %v404, %v1374
        %v1486 = vmul.f32 %v405, %v1374
        %v1487 = vmul.f32 %v406, %v1374
        %v1488 = vmul.f32 %v407, %v1374
        %v1489 = vmul.f32 %v408, %v1374
        %v1490 = vmul.f32 %v409, %v1374
        %v1491 = vmul.f32 %v410, %v1378
        %v1492 = vmul.f32 %v411, %v1378
        %v1493 = vmul.f32 %v412, %v1378
        %v1494 = vmul.f32 %v413, %v1378
        %v1495 = vmul.f32 %v414, %v1378
        %v1496 = vmul.f32 %v415, %v1378
        %v1497 = vmul.f32 %v416, %v1378
        %v1498 = vmul.f32 %v417, %v1378
        %v1499 = vmul.f32 %v418, %v1378
        %v1500 = vmul.f32 %v419, %v1378
        %v1501 = vmul.f32 %v420, %v1378
        %v1502 = vmul.f32 %v421, %v1378
        %v1503 = vmul.f32 %v422, %v1378
        %v1504 = vmul.f32 %v423, %v1378
        %v1505 = vmul.f32 %v424, %v1378
        %v1506 = vmul.f32 %v425, %v1378
        %v1507 = vmul.f32 %v426, %v1378
        %v1508 = vmul.f32 %v427, %v1378
        %v1509 = vmul.f32 %v428, %v1378
        %v1510 = vmul.f32 %v429, %v1378
        %v1511 = vmul.f32 %v430, %v1378
        %v1512 = vmul.f32 %v431, %v1378
        %v1513 = vmul.f32 %v432, %v1378
        %v1514 = vmul.f32 %v433, %v1378
        %v1515 = vmul.f32 %v434, %v1378
        %v1516 = vmul.f32 %v435, %v1382
        %v1517 = vmul.f32 %v436, %v1382
        %v1518 = vmul.f32 %v437, %v1382
        %v1519 = vmul.f32 %v438, %v1382
        %v1520 = vmul.f32 %v439, %v1382
        %v1521 = vmul.f32 %v440, %v1382
        %v1522 = vmul.f32 %v441, %v1382
        %v1523 = vmul.f32 %v442, %v1382
        %v1524 = vmul.f32 %v443, %v1382
        %v1525 = vmul.f32 %v444, %v1382
        %v1526 = vmul.f32 %v445, %v1382
        %v1527 = vmul.f32 %v446, %v1382
        %v1528 = vmul.f32 %v447, %v1382
        %v1529 = vmul.f32 %v448, %v1382
        %v1530 = vmul.f32 %v449, %v1382
        %v1531 = vmul.f32 %v450, %v1382
        %v1532 = vmul.f32 %v451, %v1382
        %v1533 = vmul.f32 %v452, %v1382
        %v1534 = vmul.f32 %v453, %v1382
        %v1535 = vmul.f32 %v454, %v1382
        %v1536 = vmul.f32 %v455, %v1382
        %v1537 = vmul.f32 %v456, %v1382
        %v1538 = vmul.f32 %v457, %v1382
        %v1539 = vmul.f32 %v458, %v1382
        %v1540 = vmul.f32 %v459, %v1382
        %v1541 = vmul.f32 %v460, %v1386
        %v1542 = vmul.f32 %v461, %v1386
        %v1543 = vmul.f32 %v462, %v1386
        %v1544 = vmul.f32 %v463, %v1386
        %v1545 = vmul.f32 %v464, %v1386
        %v1546 = vmul.f32 %v465, %v1386
        %v1547 = vmul.f32 %v466, %v1386
        %v1548 = vmul.f32 %v467, %v1386
        %v1549 = vmul.f32 %v468, %v1386
        %v1550 = vmul.f32 %v469, %v1386
        %v1551 = vmul.f32 %v470, %v1386
        %v1552 = vmul.f32 %v471, %v1386
        %v1553 = vmul.f32 %v472, %v1386
        %v1554 = vmul.f32 %v473, %v1386
        %v1555 = vmul.f32 %v474, %v1386
        %v1556 = vmul.f32 %v475, %v1386
        %v1557 = vmul.f32 %v476, %v1386
        %v1558 = vmul.f32 %v477, %v1386
        %v1559 = vmul.f32 %v478, %v1386
        %v1560 = vmul.f32 %v479, %v1386
        %v1561 = vmul.f32 %v480, %v1386
        %v1562 = vmul.f32 %v481, %v1386
        %v1563 = vmul.f32 %v482, %v1386
        %v1564 = vmul.f32 %v483, %v1386
        %v1565 = vmul.f32 %v484, %v1386
        %v1566 = vmul.f32 %v485, %v1390
        %v1567 = vmul.f32 %v486, %v1390
        %v1568 = vmul.f32 %v487, %v1390
        %v1569 = vmul.f32 %v488, %v1390
        %v1570 = vmul.f32 %v489, %v1390
        %v1571 = vmul.f32 %v490, %v1390
        %v1572 = vmul.f32 %v491, %v1390
        %v1573 = vmul.f32 %v492, %v1390
        %v1574 = vmul.f32 %v493, %v1390
        %v1575 = vmul.f32 %v494, %v1390
        %v1576 = vmul.f32 %v495, %v1390
        %v1577 = vmul.f32 %v496, %v1390
        %v1578 = vmul.f32 %v497, %v1390
        %v1579 = vmul.f32 %v498, %v1390
        %v1580 = vmul.f32 %v499, %v1390
        %v1581 = vmul.f32 %v500, %v1390
        %v1582 = vmul.f32 %v501, %v1390
        %v1583 = vmul.f32 %v502, %v1390
        %v1584 = vmul.f32 %v503, %v1390
        %v1585 = vmul.f32 %v504, %v1390
        %v1586 = vmul.f32 %v505, %v1390
        %v1587 = vmul.f32 %v506, %v1390
        %v1588 = vmul.f32 %v507, %v1390
        %v1589 = vmul.f32 %v508, %v1390
        %v1590 = vmul.f32 %v509, %v1390
        %v1591 = vld [vmem:[%s270] sm:$0xff]
        %v1592 = vld [vmem:[%s270 + $0x8] sm:$0xff]
        %v1593 = vld [vmem:[%s270 + $0x10] sm:$0xff]
        %v1594 = vld [vmem:[%s270 + $0x18] sm:$0xff]
        %v1595 = vld [vmem:[%s270 + $0x20] sm:$0xff]
        %v1596 = vld [vmem:[%s270 + $0x28] sm:$0xff]
        %v1597 = vld [vmem:[%s270 + $0x30] sm:$0xff]
        %v1598 = vld [vmem:[%s270 + $0x38] sm:$0xff]
        %v1599 = vld [vmem:[%s270 + $0x40] sm:$0xff]
        %v1600 = vld [vmem:[%s270 + $0x48] sm:$0xff]
        %v1601 = vld [vmem:[%s270 + $0x50] sm:$0xff]
        %v1602 = vld [vmem:[%s270 + $0x58] sm:$0xff]
        %v1603 = vld [vmem:[%s270 + $0x60] sm:$0xff]
        %v1604 = vld [vmem:[%s270 + $0x68] sm:$0xff]
        %v1605 = vld [vmem:[%s270 + $0x70] sm:$0xff]
        %v1606 = vld [vmem:[%s270 + $0x78] sm:$0xff]
        %v1607 = vld [vmem:[%s270 + $0x80] sm:$0xff]
        %v1608 = vld [vmem:[%s270 + $0x88] sm:$0xff]
        %v1609 = vld [vmem:[%s270 + $0x90] sm:$0xff]
        %v1610 = vld [vmem:[%s270 + $0x98] sm:$0xff]
        %v1611 = vld [vmem:[%s270 + $0xa0] sm:$0xff]
        %v1612 = vld [vmem:[%s270 + $0xa8] sm:$0xff]
        %v1613 = vld [vmem:[%s270 + $0xb0] sm:$0xff]
        %v1614 = vld [vmem:[%s270 + $0xb8] sm:$0xff]
        %v1615 = vld [vmem:[%s270 + $0xc0] sm:$0xff]
        %v1616 = vld [vmem:[%s270 + $0xc8] sm:$0xff]
        %v1617 = vld [vmem:[%s270 + $0xd0] sm:$0xff]
        %v1618 = vld [vmem:[%s270 + $0xd8] sm:$0xff]
        %v1619 = vld [vmem:[%s270 + $0xe0] sm:$0xff]
        %v1620 = vld [vmem:[%s270 + $0xe8] sm:$0xff]
        %v1621 = vld [vmem:[%s270 + $0xf0] sm:$0xff]
        %v1622 = vld [vmem:[%s270 + $0xf8] sm:$0xff]
        %v1623 = vld [vmem:[%s270 + $0x100] sm:$0xff]
        %v1624 = vld [vmem:[%s270 + $0x108] sm:$0xff]
        %v1625 = vld [vmem:[%s270 + $0x110] sm:$0xff]
        %v1626 = vld [vmem:[%s270 + $0x118] sm:$0xff]
        %v1627 = vld [vmem:[%s270 + $0x120] sm:$0xff]
        %v1628 = vld [vmem:[%s270 + $0x128] sm:$0xff]
        %v1629 = vld [vmem:[%s270 + $0x130] sm:$0xff]
        %v1630 = vld [vmem:[%s270 + $0x138] sm:$0xff]
        %v1631 = vld [vmem:[%s270 + $0x140] sm:$0xff]
        %v1632 = vld [vmem:[%s270 + $0x148] sm:$0xff]
        %v1633 = vld [vmem:[%s270 + $0x150] sm:$0xff]
        %v1634 = vld [vmem:[%s270 + $0x158] sm:$0xff]
        %v1635 = vld [vmem:[%s270 + $0x160] sm:$0xff]
        %v1636 = vld [vmem:[%s270 + $0x168] sm:$0xff]
        %v1637 = vld [vmem:[%s270 + $0x170] sm:$0xff]
        %v1638 = vld [vmem:[%s270 + $0x178] sm:$0xff]
        %v1639 = vld [vmem:[%s270 + $0x180] sm:$0xff]
        %v1640 = vld [vmem:[%s270 + $0x188] sm:$0xff]
        %v1641 = vld [vmem:[%s270 + $0x190] sm:$0xff]
        %v1642 = vld [vmem:[%s270 + $0x198] sm:$0xff]
        %v1643 = vld [vmem:[%s270 + $0x1a0] sm:$0xff]
        %v1644 = vld [vmem:[%s270 + $0x1a8] sm:$0xff]
        %v1645 = vld [vmem:[%s270 + $0x1b0] sm:$0xff]
        %v1646 = vld [vmem:[%s270 + $0x1b8] sm:$0xff]
        %v1647 = vld [vmem:[%s270 + $0x1c0] sm:$0xff]
        %v1648 = vld [vmem:[%s270 + $0x1c8] sm:$0xff]
        %v1649 = vld [vmem:[%s270 + $0x1d0] sm:$0xff]
        %v1650 = vld [vmem:[%s270 + $0x1d8] sm:$0xff]
        %v1651 = vld [vmem:[%s270 + $0x1e0] sm:$0xff]
        %v1652 = vld [vmem:[%s270 + $0x1e8] sm:$0xff]
        %v1653 = vld [vmem:[%s270 + $0x1f0] sm:$0xff]
        %v1654 = vld [vmem:[%s270 + $0x1f8] sm:$0xff]
        %v1655 = vld [vmem:[%s270 + $0x200] sm:$0xff]
        %v1656 = vld [vmem:[%s270 + $0x208] sm:$0xff]
        %v1657 = vld [vmem:[%s270 + $0x210] sm:$0xff]
        %v1658 = vld [vmem:[%s270 + $0x218] sm:$0xff]
        %v1659 = vld [vmem:[%s270 + $0x220] sm:$0xff]
        %v1660 = vld [vmem:[%s270 + $0x228] sm:$0xff]
        %v1661 = vld [vmem:[%s270 + $0x230] sm:$0xff]
        %v1662 = vld [vmem:[%s270 + $0x238] sm:$0xff]
        %v1663 = vld [vmem:[%s270 + $0x240] sm:$0xff]
        %v1664 = vld [vmem:[%s270 + $0x248] sm:$0xff]
        %v1665 = vld [vmem:[%s270 + $0x250] sm:$0xff]
        %v1666 = vld [vmem:[%s270 + $0x258] sm:$0xff]
        %v1667 = vld [vmem:[%s270 + $0x260] sm:$0xff]
        %v1668 = vld [vmem:[%s270 + $0x268] sm:$0xff]
        %v1669 = vld [vmem:[%s270 + $0x270] sm:$0xff]
        %v1670 = vld [vmem:[%s270 + $0x278] sm:$0xff]
        %v1671 = vld [vmem:[%s270 + $0x280] sm:$0xff]
        %v1672 = vld [vmem:[%s270 + $0x288] sm:$0xff]
        %v1673 = vld [vmem:[%s270 + $0x290] sm:$0xff]
        %v1674 = vld [vmem:[%s270 + $0x298] sm:$0xff]
        %v1675 = vld [vmem:[%s270 + $0x2a0] sm:$0xff]
        %v1676 = vld [vmem:[%s270 + $0x2a8] sm:$0xff]
        %v1677 = vld [vmem:[%s270 + $0x2b0] sm:$0xff]
        %v1678 = vld [vmem:[%s270 + $0x2b8] sm:$0xff]
        %v1679 = vld [vmem:[%s270 + $0x2c0] sm:$0xff]
        %v1680 = vld [vmem:[%s270 + $0x2c8] sm:$0xff]
        %v1681 = vld [vmem:[%s270 + $0x2d0] sm:$0xff]
        %v1682 = vld [vmem:[%s270 + $0x2d8] sm:$0xff]
        %v1683 = vld [vmem:[%s270 + $0x2e0] sm:$0xff]
        %v1684 = vld [vmem:[%s270 + $0x2e8] sm:$0xff]
        %v1685 = vld [vmem:[%s270 + $0x2f0] sm:$0xff]
        %v1686 = vld [vmem:[%s270 + $0x2f8] sm:$0xff]
        %v1687 = vld [vmem:[%s270 + $0x300] sm:$0xff]
        %v1688 = vld [vmem:[%s270 + $0x308] sm:$0xff]
        %v1689 = vld [vmem:[%s270 + $0x310] sm:$0xff]
        %v1690 = vld [vmem:[%s270 + $0x318] sm:$0xff]
        %v1691 = vld [vmem:[%s270 + $0x320] sm:$0xff]
        %v1692 = vld [vmem:[%s270 + $0x328] sm:$0xff]
        %v1693 = vld [vmem:[%s270 + $0x330] sm:$0xff]
        %v1694 = vld [vmem:[%s270 + $0x338] sm:$0xff]
        %v1695 = vld [vmem:[%s270 + $0x340] sm:$0xff]
        %v1696 = vld [vmem:[%s270 + $0x348] sm:$0xff]
        %v1697 = vld [vmem:[%s270 + $0x350] sm:$0xff]
        %v1698 = vld [vmem:[%s270 + $0x358] sm:$0xff]
        %v1699 = vld [vmem:[%s270 + $0x360] sm:$0xff]
        %v1700 = vld [vmem:[%s270 + $0x368] sm:$0xff]
        %v1701 = vld [vmem:[%s270 + $0x370] sm:$0xff]
        %v1702 = vld [vmem:[%s270 + $0x378] sm:$0xff]
        %v1703 = vld [vmem:[%s270 + $0x380] sm:$0xff]
        %v1704 = vld [vmem:[%s270 + $0x388] sm:$0xff]
        %v1705 = vld [vmem:[%s270 + $0x390] sm:$0xff]
        %v1706 = vld [vmem:[%s270 + $0x398] sm:$0xff]
        %v1707 = vld [vmem:[%s270 + $0x3a0] sm:$0xff]
        %v1708 = vld [vmem:[%s270 + $0x3a8] sm:$0xff]
        %v1709 = vld [vmem:[%s270 + $0x3b0] sm:$0xff]
        %v1710 = vld [vmem:[%s270 + $0x3b8] sm:$0xff]
        %v1711 = vld [vmem:[%s270 + $0x3c0] sm:$0xff]
        %v1712 = vld [vmem:[%s270 + $0x3c8] sm:$0xff]
        %v1713 = vld [vmem:[%s270 + $0x3d0] sm:$0xff]
        %v1714 = vld [vmem:[%s270 + $0x3d8] sm:$0xff]
        %v1715 = vld [vmem:[%s270 + $0x3e0] sm:$0xff]
        %v1716 = vld [vmem:[%s270 + $0x3e8] sm:$0xff]
        %v1717 = vld [vmem:[%s270 + $0x3f0] sm:$0xff]
        %v1718 = vld [vmem:[%s270 + $0x3f8] sm:$0xff]
        %v1719 = vld [vmem:[%s270 + $0x400] sm:$0xff]
        %v1720 = vld [vmem:[%s270 + $0x408] sm:$0xff]
        %v1721 = vld [vmem:[%s270 + $0x410] sm:$0xff]
        %v1722 = vld [vmem:[%s270 + $0x418] sm:$0xff]
        %v1723 = vld [vmem:[%s270 + $0x420] sm:$0xff]
        %v1724 = vld [vmem:[%s270 + $0x428] sm:$0xff]
        %v1725 = vld [vmem:[%s270 + $0x430] sm:$0xff]
        %v1726 = vld [vmem:[%s270 + $0x438] sm:$0xff]
        %v1727 = vld [vmem:[%s270 + $0x440] sm:$0xff]
        %v1728 = vld [vmem:[%s270 + $0x448] sm:$0xff]
        %v1729 = vld [vmem:[%s270 + $0x450] sm:$0xff]
        %v1730 = vld [vmem:[%s270 + $0x458] sm:$0xff]
        %v1731 = vld [vmem:[%s270 + $0x460] sm:$0xff]
        %v1732 = vld [vmem:[%s270 + $0x468] sm:$0xff]
        %v1733 = vld [vmem:[%s270 + $0x470] sm:$0xff]
        %v1734 = vld [vmem:[%s270 + $0x478] sm:$0xff]
        %v1735 = vld [vmem:[%s270 + $0x480] sm:$0xff]
        %v1736 = vld [vmem:[%s270 + $0x488] sm:$0xff]
        %v1737 = vld [vmem:[%s270 + $0x490] sm:$0xff]
        %v1738 = vld [vmem:[%s270 + $0x498] sm:$0xff]
        %v1739 = vld [vmem:[%s270 + $0x4a0] sm:$0xff]
        %v1740 = vld [vmem:[%s270 + $0x4a8] sm:$0xff]
        %v1741 = vld [vmem:[%s270 + $0x4b0] sm:$0xff]
        %v1742 = vld [vmem:[%s270 + $0x4b8] sm:$0xff]
        %v1743 = vld [vmem:[%s270 + $0x4c0] sm:$0xff]
        %v1744 = vld [vmem:[%s270 + $0x4c8] sm:$0xff]
        %v1745 = vld [vmem:[%s270 + $0x4d0] sm:$0xff]
        %v1746 = vld [vmem:[%s270 + $0x4d8] sm:$0xff]
        %v1747 = vld [vmem:[%s270 + $0x4e0] sm:$0xff]
        %v1748 = vld [vmem:[%s270 + $0x4e8] sm:$0xff]
        %v1749 = vld [vmem:[%s270 + $0x4f0] sm:$0xff]
        %v1750 = vld [vmem:[%s270 + $0x4f8] sm:$0xff]
        %v1751 = vld [vmem:[%s270 + $0x500] sm:$0xff]
        %v1752 = vld [vmem:[%s270 + $0x508] sm:$0xff]
        %v1753 = vld [vmem:[%s270 + $0x510] sm:$0xff]
        %v1754 = vld [vmem:[%s270 + $0x518] sm:$0xff]
        %v1755 = vld [vmem:[%s270 + $0x520] sm:$0xff]
        %v1756 = vld [vmem:[%s270 + $0x528] sm:$0xff]
        %v1757 = vld [vmem:[%s270 + $0x530] sm:$0xff]
        %v1758 = vld [vmem:[%s270 + $0x538] sm:$0xff]
        %v1759 = vld [vmem:[%s270 + $0x540] sm:$0xff]
        %v1760 = vld [vmem:[%s270 + $0x548] sm:$0xff]
        %v1761 = vld [vmem:[%s270 + $0x550] sm:$0xff]
        %v1762 = vld [vmem:[%s270 + $0x558] sm:$0xff]
        %v1763 = vld [vmem:[%s270 + $0x560] sm:$0xff]
        %v1764 = vld [vmem:[%s270 + $0x568] sm:$0xff]
        %v1765 = vld [vmem:[%s270 + $0x570] sm:$0xff]
        %v1766 = vld [vmem:[%s270 + $0x578] sm:$0xff]
        %v1767 = vld [vmem:[%s270 + $0x580] sm:$0xff]
        %v1768 = vld [vmem:[%s270 + $0x588] sm:$0xff]
        %v1769 = vld [vmem:[%s270 + $0x590] sm:$0xff]
        %v1770 = vld [vmem:[%s270 + $0x598] sm:$0xff]
        %v1771 = vld [vmem:[%s270 + $0x5a0] sm:$0xff]
        %v1772 = vld [vmem:[%s270 + $0x5a8] sm:$0xff]
        %v1773 = vld [vmem:[%s270 + $0x5b0] sm:$0xff]
        %v1774 = vld [vmem:[%s270 + $0x5b8] sm:$0xff]
        %v1775 = vld [vmem:[%s270 + $0x5c0] sm:$0xff]
        %v1776 = vld [vmem:[%s270 + $0x5c8] sm:$0xff]
        %v1777 = vld [vmem:[%s270 + $0x5d0] sm:$0xff]
        %v1778 = vld [vmem:[%s270 + $0x5d8] sm:$0xff]
        %v1779 = vld [vmem:[%s270 + $0x5e0] sm:$0xff]
        %v1780 = vld [vmem:[%s270 + $0x5e8] sm:$0xff]
        %v1781 = vld [vmem:[%s270 + $0x5f0] sm:$0xff]
        %v1782 = vld [vmem:[%s270 + $0x5f8] sm:$0xff]
        %v1783 = vld [vmem:[%s270 + $0x600] sm:$0xff]
        %v1784 = vld [vmem:[%s270 + $0x608] sm:$0xff]
        %v1785 = vld [vmem:[%s270 + $0x610] sm:$0xff]
        %v1786 = vld [vmem:[%s270 + $0x618] sm:$0xff]
        %v1787 = vld [vmem:[%s270 + $0x620] sm:$0xff]
        %v1788 = vld [vmem:[%s270 + $0x628] sm:$0xff]
        %v1789 = vld [vmem:[%s270 + $0x630] sm:$0xff]
        %v1790 = vld [vmem:[%s270 + $0x638] sm:$0xff]
        %v1791 = vadd.f32 %v1391, %v1591
        %v1792 = vadd.f32 %v1392, %v1592
        %v1793 = vadd.f32 %v1393, %v1593
        %v1794 = vadd.f32 %v1394, %v1594
        %v1795 = vadd.f32 %v1395, %v1595
        %v1796 = vadd.f32 %v1396, %v1596
        %v1797 = vadd.f32 %v1397, %v1597
        %v1798 = vadd.f32 %v1398, %v1598
        %v1799 = vadd.f32 %v1399, %v1599
        %v1800 = vadd.f32 %v1400, %v1600
        %v1801 = vadd.f32 %v1401, %v1601
        %v1802 = vadd.f32 %v1402, %v1602
        %v1803 = vadd.f32 %v1403, %v1603
        %v1804 = vadd.f32 %v1404, %v1604
        %v1805 = vadd.f32 %v1405, %v1605
        %v1806 = vadd.f32 %v1406, %v1606
        %v1807 = vadd.f32 %v1407, %v1607
        %v1808 = vadd.f32 %v1408, %v1608
        %v1809 = vadd.f32 %v1409, %v1609
        %v1810 = vadd.f32 %v1410, %v1610
        %v1811 = vadd.f32 %v1411, %v1611
        %v1812 = vadd.f32 %v1412, %v1612
        %v1813 = vadd.f32 %v1413, %v1613
        %v1814 = vadd.f32 %v1414, %v1614
        %v1815 = vadd.f32 %v1415, %v1615
        %v1816 = vadd.f32 %v1416, %v1616
        %v1817 = vadd.f32 %v1417, %v1617
        %v1818 = vadd.f32 %v1418, %v1618
        %v1819 = vadd.f32 %v1419, %v1619
        %v1820 = vadd.f32 %v1420, %v1620
        %v1821 = vadd.f32 %v1421, %v1621
        %v1822 = vadd.f32 %v1422, %v1622
        %v1823 = vadd.f32 %v1423, %v1623
        %v1824 = vadd.f32 %v1424, %v1624
        %v1825 = vadd.f32 %v1425, %v1625
        %v1826 = vadd.f32 %v1426, %v1626
        %v1827 = vadd.f32 %v1427, %v1627
        %v1828 = vadd.f32 %v1428, %v1628
        %v1829 = vadd.f32 %v1429, %v1629
        %v1830 = vadd.f32 %v1430, %v1630
        %v1831 = vadd.f32 %v1431, %v1631
        %v1832 = vadd.f32 %v1432, %v1632
        %v1833 = vadd.f32 %v1433, %v1633
        %v1834 = vadd.f32 %v1434, %v1634
        %v1835 = vadd.f32 %v1435, %v1635
        %v1836 = vadd.f32 %v1436, %v1636
        %v1837 = vadd.f32 %v1437, %v1637
        %v1838 = vadd.f32 %v1438, %v1638
        %v1839 = vadd.f32 %v1439, %v1639
        %v1840 = vadd.f32 %v1440, %v1640
        %v1841 = vadd.f32 %v1441, %v1641
        %v1842 = vadd.f32 %v1442, %v1642
        %v1843 = vadd.f32 %v1443, %v1643
        %v1844 = vadd.f32 %v1444, %v1644
        %v1845 = vadd.f32 %v1445, %v1645
        %v1846 = vadd.f32 %v1446, %v1646
        %v1847 = vadd.f32 %v1447, %v1647
        %v1848 = vadd.f32 %v1448, %v1648
        %v1849 = vadd.f32 %v1449, %v1649
        %v1850 = vadd.f32 %v1450, %v1650
        %v1851 = vadd.f32 %v1451, %v1651
        %v1852 = vadd.f32 %v1452, %v1652
        %v1853 = vadd.f32 %v1453, %v1653
        %v1854 = vadd.f32 %v1454, %v1654
        %v1855 = vadd.f32 %v1455, %v1655
        %v1856 = vadd.f32 %v1456, %v1656
        %v1857 = vadd.f32 %v1457, %v1657
        %v1858 = vadd.f32 %v1458, %v1658
        %v1859 = vadd.f32 %v1459, %v1659
        %v1860 = vadd.f32 %v1460, %v1660
        %v1861 = vadd.f32 %v1461, %v1661
        %v1862 = vadd.f32 %v1462, %v1662
        %v1863 = vadd.f32 %v1463, %v1663
        %v1864 = vadd.f32 %v1464, %v1664
        %v1865 = vadd.f32 %v1465, %v1665
        %v1866 = vadd.f32 %v1466, %v1666
        %v1867 = vadd.f32 %v1467, %v1667
        %v1868 = vadd.f32 %v1468, %v1668
        %v1869 = vadd.f32 %v1469, %v1669
        %v1870 = vadd.f32 %v1470, %v1670
        %v1871 = vadd.f32 %v1471, %v1671
        %v1872 = vadd.f32 %v1472, %v1672
        %v1873 = vadd.f32 %v1473, %v1673
        %v1874 = vadd.f32 %v1474, %v1674
        %v1875 = vadd.f32 %v1475, %v1675
        %v1876 = vadd.f32 %v1476, %v1676
        %v1877 = vadd.f32 %v1477, %v1677
        %v1878 = vadd.f32 %v1478, %v1678
        %v1879 = vadd.f32 %v1479, %v1679
        %v1880 = vadd.f32 %v1480, %v1680
        %v1881 = vadd.f32 %v1481, %v1681
        %v1882 = vadd.f32 %v1482, %v1682
        %v1883 = vadd.f32 %v1483, %v1683
        %v1884 = vadd.f32 %v1484, %v1684
        %v1885 = vadd.f32 %v1485, %v1685
        %v1886 = vadd.f32 %v1486, %v1686
        %v1887 = vadd.f32 %v1487, %v1687
        %v1888 = vadd.f32 %v1488, %v1688
        %v1889 = vadd.f32 %v1489, %v1689
        %v1890 = vadd.f32 %v1490, %v1690
        %v1891 = vadd.f32 %v1491, %v1691
        %v1892 = vadd.f32 %v1492, %v1692
        %v1893 = vadd.f32 %v1493, %v1693
        %v1894 = vadd.f32 %v1494, %v1694
        %v1895 = vadd.f32 %v1495, %v1695
        %v1896 = vadd.f32 %v1496, %v1696
        %v1897 = vadd.f32 %v1497, %v1697
        %v1898 = vadd.f32 %v1498, %v1698
        %v1899 = vadd.f32 %v1499, %v1699
        %v1900 = vadd.f32 %v1500, %v1700
        %v1901 = vadd.f32 %v1501, %v1701
        %v1902 = vadd.f32 %v1502, %v1702
        %v1903 = vadd.f32 %v1503, %v1703
        %v1904 = vadd.f32 %v1504, %v1704
        %v1905 = vadd.f32 %v1505, %v1705
        %v1906 = vadd.f32 %v1506, %v1706
        %v1907 = vadd.f32 %v1507, %v1707
        %v1908 = vadd.f32 %v1508, %v1708
        %v1909 = vadd.f32 %v1509, %v1709
        %v1910 = vadd.f32 %v1510, %v1710
        %v1911 = vadd.f32 %v1511, %v1711
        %v1912 = vadd.f32 %v1512, %v1712
        %v1913 = vadd.f32 %v1513, %v1713
        %v1914 = vadd.f32 %v1514, %v1714
        %v1915 = vadd.f32 %v1515, %v1715
        %v1916 = vadd.f32 %v1516, %v1716
        %v1917 = vadd.f32 %v1517, %v1717
        %v1918 = vadd.f32 %v1518, %v1718
        %v1919 = vadd.f32 %v1519, %v1719
        %v1920 = vadd.f32 %v1520, %v1720
        %v1921 = vadd.f32 %v1521, %v1721
        %v1922 = vadd.f32 %v1522, %v1722
        %v1923 = vadd.f32 %v1523, %v1723
        %v1924 = vadd.f32 %v1524, %v1724
        %v1925 = vadd.f32 %v1525, %v1725
        %v1926 = vadd.f32 %v1526, %v1726
        %v1927 = vadd.f32 %v1527, %v1727
        %v1928 = vadd.f32 %v1528, %v1728
        %v1929 = vadd.f32 %v1529, %v1729
        %v1930 = vadd.f32 %v1530, %v1730
        %v1931 = vadd.f32 %v1531, %v1731
        %v1932 = vadd.f32 %v1532, %v1732
        %v1933 = vadd.f32 %v1533, %v1733
        %v1934 = vadd.f32 %v1534, %v1734
        %v1935 = vadd.f32 %v1535, %v1735
        %v1936 = vadd.f32 %v1536, %v1736
        %v1937 = vadd.f32 %v1537, %v1737
        %v1938 = vadd.f32 %v1538, %v1738
        %v1939 = vadd.f32 %v1539, %v1739
        %v1940 = vadd.f32 %v1540, %v1740
        %v1941 = vadd.f32 %v1541, %v1741
        %v1942 = vadd.f32 %v1542, %v1742
        %v1943 = vadd.f32 %v1543, %v1743
        %v1944 = vadd.f32 %v1544, %v1744
        %v1945 = vadd.f32 %v1545, %v1745
        %v1946 = vadd.f32 %v1546, %v1746
        %v1947 = vadd.f32 %v1547, %v1747
        %v1948 = vadd.f32 %v1548, %v1748
        %v1949 = vadd.f32 %v1549, %v1749
        %v1950 = vadd.f32 %v1550, %v1750
        %v1951 = vadd.f32 %v1551, %v1751
        %v1952 = vadd.f32 %v1552, %v1752
        %v1953 = vadd.f32 %v1553, %v1753
        %v1954 = vadd.f32 %v1554, %v1754
        %v1955 = vadd.f32 %v1555, %v1755
        %v1956 = vadd.f32 %v1556, %v1756
        %v1957 = vadd.f32 %v1557, %v1757
        %v1958 = vadd.f32 %v1558, %v1758
        %v1959 = vadd.f32 %v1559, %v1759
        %v1960 = vadd.f32 %v1560, %v1760
        %v1961 = vadd.f32 %v1561, %v1761
        %v1962 = vadd.f32 %v1562, %v1762
        %v1963 = vadd.f32 %v1563, %v1763
        %v1964 = vadd.f32 %v1564, %v1764
        %v1965 = vadd.f32 %v1565, %v1765
        %v1966 = vadd.f32 %v1566, %v1766
        %v1967 = vadd.f32 %v1567, %v1767
        %v1968 = vadd.f32 %v1568, %v1768
        %v1969 = vadd.f32 %v1569, %v1769
        %v1970 = vadd.f32 %v1570, %v1770
        %v1971 = vadd.f32 %v1571, %v1771
        %v1972 = vadd.f32 %v1572, %v1772
        %v1973 = vadd.f32 %v1573, %v1773
        %v1974 = vadd.f32 %v1574, %v1774
        %v1975 = vadd.f32 %v1575, %v1775
        %v1976 = vadd.f32 %v1576, %v1776
        %v1977 = vadd.f32 %v1577, %v1777
        %v1978 = vadd.f32 %v1578, %v1778
        %v1979 = vadd.f32 %v1579, %v1779
        %v1980 = vadd.f32 %v1580, %v1780
        %v1981 = vadd.f32 %v1581, %v1781
        %v1982 = vadd.f32 %v1582, %v1782
        %v1983 = vadd.f32 %v1583, %v1783
        %v1984 = vadd.f32 %v1584, %v1784
        %v1985 = vadd.f32 %v1585, %v1785
        %v1986 = vadd.f32 %v1586, %v1786
        %v1987 = vadd.f32 %v1587, %v1787
        %v1988 = vadd.f32 %v1588, %v1788
        %v1989 = vadd.f32 %v1589, %v1789
        %v1990 = vadd.f32 %v1590, %v1790
        %v1991 = vmax.f32 %v1791, 0.0
        %v1992 = vmax.f32 %v1792, 0.0
        %v1993 = vmax.f32 %v1793, 0.0
        %v1994 = vmax.f32 %v1794, 0.0
        %v1995 = vmax.f32 %v1795, 0.0
        %v1996 = vmax.f32 %v1796, 0.0
        %v1997 = vmax.f32 %v1797, 0.0
        %v1998 = vmax.f32 %v1798, 0.0
        %v1999 = vmax.f32 %v1799, 0.0
        %v2000 = vmax.f32 %v1800, 0.0
        %v2001 = vmax.f32 %v1801, 0.0
        %v2002 = vmax.f32 %v1802, 0.0
        %v2003 = vmax.f32 %v1803, 0.0
        %v2004 = vmax.f32 %v1804, 0.0
        %v2005 = vmax.f32 %v1805, 0.0
        %v2006 = vmax.f32 %v1806, 0.0
        %v2007 = vmax.f32 %v1807, 0.0
        %v2008 = vmax.f32 %v1808, 0.0
        %v2009 = vmax.f32 %v1809, 0.0
        %v2010 = vmax.f32 %v1810, 0.0
        %v2011 = vmax.f32 %v1811, 0.0
        %v2012 = vmax.f32 %v1812, 0.0
        %v2013 = vmax.f32 %v1813, 0.0
        %v2014 = vmax.f32 %v1814, 0.0
        %v2015 = vmax.f32 %v1815, 0.0
        %v2016 = vmax.f32 %v1816, 0.0
        %v2017 = vmax.f32 %v1817, 0.0
        %v2018 = vmax.f32 %v1818, 0.0
        %v2019 = vmax.f32 %v1819, 0.0
        %v2020 = vmax.f32 %v1820, 0.0
        %v2021 = vmax.f32 %v1821, 0.0
        %v2022 = vmax.f32 %v1822, 0.0
        %v2023 = vmax.f32 %v1823, 0.0
        %v2024 = vmax.f32 %v1824, 0.0
        %v2025 = vmax.f32 %v1825, 0.0
        %v2026 = vmax.f32 %v1826, 0.0
        %v2027 = vmax.f32 %v1827, 0.0
        %v2028 = vmax.f32 %v1828, 0.0
        %v2029 = vmax.f32 %v1829, 0.0
        %v2030 = vmax.f32 %v1830, 0.0
        %v2031 = vmax.f32 %v1831, 0.0
        %v2032 = vmax.f32 %v1832, 0.0
        %v2033 = vmax.f32 %v1833, 0.0
        %v2034 = vmax.f32 %v1834, 0.0
        %v2035 = vmax.f32 %v1835, 0.0
        %v2036 = vmax.f32 %v1836, 0.0
        %v2037 = vmax.f32 %v1837, 0.0
        %v2038 = vmax.f32 %v1838, 0.0
        %v2039 = vmax.f32 %v1839, 0.0
        %v2040 = vmax.f32 %v1840, 0.0
        %v2041 = vmax.f32 %v1841, 0.0
        %v2042 = vmax.f32 %v1842, 0.0
        %v2043 = vmax.f32 %v1843, 0.0
        %v2044 = vmax.f32 %v1844, 0.0
        %v2045 = vmax.f32 %v1845, 0.0
        %v2046 = vmax.f32 %v1846, 0.0
        %v2047 = vmax.f32 %v1847, 0.0
        %v2048 = vmax.f32 %v1848, 0.0
        %v2049 = vmax.f32 %v1849, 0.0
        %v2050 = vmax.f32 %v1850, 0.0
        %v2051 = vmax.f32 %v1851, 0.0
        %v2052 = vmax.f32 %v1852, 0.0
        %v2053 = vmax.f32 %v1853, 0.0
        %v2054 = vmax.f32 %v1854, 0.0
        %v2055 = vmax.f32 %v1855, 0.0
        %v2056 = vmax.f32 %v1856, 0.0
        %v2057 = vmax.f32 %v1857, 0.0
        %v2058 = vmax.f32 %v1858, 0.0
        %v2059 = vmax.f32 %v1859, 0.0
        %v2060 = vmax.f32 %v1860, 0.0
        %v2061 = vmax.f32 %v1861, 0.0
        %v2062 = vmax.f32 %v1862, 0.0
        %v2063 = vmax.f32 %v1863, 0.0
        %v2064 = vmax.f32 %v1864, 0.0
        %v2065 = vmax.f32 %v1865, 0.0
        %v2066 = vmax.f32 %v1866, 0.0
        %v2067 = vmax.f32 %v1867, 0.0
        %v2068 = vmax.f32 %v1868, 0.0
        %v2069 = vmax.f32 %v1869, 0.0
        %v2070 = vmax.f32 %v1870, 0.0
        %v2071 = vmax.f32 %v1871, 0.0
        %v2072 = vmax.f32 %v1872, 0.0
        %v2073 = vmax.f32 %v1873, 0.0
        %v2074 = vmax.f32 %v1874, 0.0
        %v2075 = vmax.f32 %v1875, 0.0
        %v2076 = vmax.f32 %v1876, 0.0
        %v2077 = vmax.f32 %v1877, 0.0
        %v2078 = vmax.f32 %v1878, 0.0
        %v2079 = vmax.f32 %v1879, 0.0
        %v2080 = vmax.f32 %v1880, 0.0
        %v2081 = vmax.f32 %v1881, 0.0
        %v2082 = vmax.f32 %v1882, 0.0
        %v2083 = vmax.f32 %v1883, 0.0
        %v2084 = vmax.f32 %v1884, 0.0
        %v2085 = vmax.f32 %v1885, 0.0
        %v2086 = vmax.f32 %v1886, 0.0
        %v2087 = vmax.f32 %v1887, 0.0
        %v2088 = vmax.f32 %v1888, 0.0
        %v2089 = vmax.f32 %v1889, 0.0
        %v2090 = vmax.f32 %v1890, 0.0
        %v2091 = vmax.f32 %v1891, 0.0
        %v2092 = vmax.f32 %v1892, 0.0
        %v2093 = vmax.f32 %v1893, 0.0
        %v2094 = vmax.f32 %v1894, 0.0
        %v2095 = vmax.f32 %v1895, 0.0
        %v2096 = vmax.f32 %v1896, 0.0
        %v2097 = vmax.f32 %v1897, 0.0
        %v2098 = vmax.f32 %v1898, 0.0
        %v2099 = vmax.f32 %v1899, 0.0
        %v2100 = vmax.f32 %v1900, 0.0
        %v2101 = vmax.f32 %v1901, 0.0
        %v2102 = vmax.f32 %v1902, 0.0
        %v2103 = vmax.f32 %v1903, 0.0
        %v2104 = vmax.f32 %v1904, 0.0
        %v2105 = vmax.f32 %v1905, 0.0
        %v2106 = vmax.f32 %v1906, 0.0
        %v2107 = vmax.f32 %v1907, 0.0
        %v2108 = vmax.f32 %v1908, 0.0
        %v2109 = vmax.f32 %v1909, 0.0
        %v2110 = vmax.f32 %v1910, 0.0
        %v2111 = vmax.f32 %v1911, 0.0
        %v2112 = vmax.f32 %v1912, 0.0
        %v2113 = vmax.f32 %v1913, 0.0
        %v2114 = vmax.f32 %v1914, 0.0
        %v2115 = vmax.f32 %v1915, 0.0
        %v2116 = vmax.f32 %v1916, 0.0
        %v2117 = vmax.f32 %v1917, 0.0
        %v2118 = vmax.f32 %v1918, 0.0
        %v2119 = vmax.f32 %v1919, 0.0
        %v2120 = vmax.f32 %v1920, 0.0
        %v2121 = vmax.f32 %v1921, 0.0
        %v2122 = vmax.f32 %v1922, 0.0
        %v2123 = vmax.f32 %v1923, 0.0
        %v2124 = vmax.f32 %v1924, 0.0
        %v2125 = vmax.f32 %v1925, 0.0
        %v2126 = vmax.f32 %v1926, 0.0
        %v2127 = vmax.f32 %v1927, 0.0
        %v2128 = vmax.f32 %v1928, 0.0
        %v2129 = vmax.f32 %v1929, 0.0
        %v2130 = vmax.f32 %v1930, 0.0
        %v2131 = vmax.f32 %v1931, 0.0
        %v2132 = vmax.f32 %v1932, 0.0
        %v2133 = vmax.f32 %v1933, 0.0
        %v2134 = vmax.f32 %v1934, 0.0
        %v2135 = vmax.f32 %v1935, 0.0
        %v2136 = vmax.f32 %v1936, 0.0
        %v2137 = vmax.f32 %v1937, 0.0
        %v2138 = vmax.f32 %v1938, 0.0
        %v2139 = vmax.f32 %v1939, 0.0
        %v2140 = vmax.f32 %v1940, 0.0
        %v2141 = vmax.f32 %v1941, 0.0
        %v2142 = vmax.f32 %v1942, 0.0
        %v2143 = vmax.f32 %v1943, 0.0
        %v2144 = vmax.f32 %v1944, 0.0
        %v2145 = vmax.f32 %v1945, 0.0
        %v2146 = vmax.f32 %v1946, 0.0
        %v2147 = vmax.f32 %v1947, 0.0
        %v2148 = vmax.f32 %v1948, 0.0
        %v2149 = vmax.f32 %v1949, 0.0
        %v2150 = vmax.f32 %v1950, 0.0
        %v2151 = vmax.f32 %v1951, 0.0
        %v2152 = vmax.f32 %v1952, 0.0
        %v2153 = vmax.f32 %v1953, 0.0
        %v2154 = vmax.f32 %v1954, 0.0
        %v2155 = vmax.f32 %v1955, 0.0
        %v2156 = vmax.f32 %v1956, 0.0
        %v2157 = vmax.f32 %v1957, 0.0
        %v2158 = vmax.f32 %v1958, 0.0
        %v2159 = vmax.f32 %v1959, 0.0
        %v2160 = vmax.f32 %v1960, 0.0
        %v2161 = vmax.f32 %v1961, 0.0
        %v2162 = vmax.f32 %v1962, 0.0
        %v2163 = vmax.f32 %v1963, 0.0
        %v2164 = vmax.f32 %v1964, 0.0
        %v2165 = vmax.f32 %v1965, 0.0
        %v2166 = vmax.f32 %v1966, 0.0
        %v2167 = vmax.f32 %v1967, 0.0
        %v2168 = vmax.f32 %v1968, 0.0
        %v2169 = vmax.f32 %v1969, 0.0
        %v2170 = vmax.f32 %v1970, 0.0
        %v2171 = vmax.f32 %v1971, 0.0
        %v2172 = vmax.f32 %v1972, 0.0
        %v2173 = vmax.f32 %v1973, 0.0
        %v2174 = vmax.f32 %v1974, 0.0
        %v2175 = vmax.f32 %v1975, 0.0
        %v2176 = vmax.f32 %v1976, 0.0
        %v2177 = vmax.f32 %v1977, 0.0
        %v2178 = vmax.f32 %v1978, 0.0
        %v2179 = vmax.f32 %v1979, 0.0
        %v2180 = vmax.f32 %v1980, 0.0
        %v2181 = vmax.f32 %v1981, 0.0
        %v2182 = vmax.f32 %v1982, 0.0
        %v2183 = vmax.f32 %v1983, 0.0
        %v2184 = vmax.f32 %v1984, 0.0
        %v2185 = vmax.f32 %v1985, 0.0
        %v2186 = vmax.f32 %v1986, 0.0
        %v2187 = vmax.f32 %v1987, 0.0
        %v2188 = vmax.f32 %v1988, 0.0
        %v2189 = vmax.f32 %v1989, 0.0
        %v2190 = vmax.f32 %v1990, 0.0
        %2191 = vst [vmem:[%s309] sm:$0xff] %v1991
        %2192 = vst [vmem:[%s309 + $0x8] sm:$0xff] %v1992
        %2193 = vst [vmem:[%s309 + $0x10] sm:$0xff] %v1993
        %2194 = vst [vmem:[%s309 + $0x18] sm:$0xff] %v1994
        %2195 = vst [vmem:[%s309 + $0x20] sm:$0xff] %v1995
        %2196 = vst [vmem:[%s309 + $0x28] sm:$0xff] %v1996
        %2197 = vst [vmem:[%s309 + $0x30] sm:$0xff] %v1997
        %2198 = vst [vmem:[%s309 + $0x38] sm:$0xff] %v1998
        %2199 = vst [vmem:[%s309 + $0x40] sm:$0xff] %v1999
        %2200 = vst [vmem:[%s309 + $0x48] sm:$0xff] %v2000
        %2201 = vst [vmem:[%s309 + $0x50] sm:$0xff] %v2001
        %2202 = vst [vmem:[%s309 + $0x58] sm:$0xff] %v2002
        %2203 = vst [vmem:[%s309 + $0x60] sm:$0xff] %v2003
        %2204 = vst [vmem:[%s309 + $0x68] sm:$0xff] %v2004
        %2205 = vst [vmem:[%s309 + $0x70] sm:$0xff] %v2005
        %2206 = vst [vmem:[%s309 + $0x78] sm:$0xff] %v2006
        %2207 = vst [vmem:[%s309 + $0x80] sm:$0xff] %v2007
        %2208 = vst [vmem:[%s309 + $0x88] sm:$0xff] %v2008
        %2209 = vst [vmem:[%s309 + $0x90] sm:$0xff] %v2009
        %2210 = vst [vmem:[%s309 + $0x98] sm:$0xff] %v2010
        %2211 = vst [vmem:[%s309 + $0xa0] sm:$0xff] %v2011
        %2212 = vst [vmem:[%s309 + $0xa8] sm:$0xff] %v2012
        %2213 = vst [vmem:[%s309 + $0xb0] sm:$0xff] %v2013
        %2214 = vst [vmem:[%s309 + $0xb8] sm:$0xff] %v2014
        %2215 = vst.msk [vmem:[%s309 + $0xc0] sm:$0xff] %vm933, %v2015
        %2216 = vst [vmem:[%s309 + $0xc8] sm:$0xff] %v2016
        %2217 = vst [vmem:[%s309 + $0xd0] sm:$0xff] %v2017
        %2218 = vst [vmem:[%s309 + $0xd8] sm:$0xff] %v2018
        %2219 = vst [vmem:[%s309 + $0xe0] sm:$0xff] %v2019
        %2220 = vst [vmem:[%s309 + $0xe8] sm:$0xff] %v2020
        %2221 = vst [vmem:[%s309 + $0xf0] sm:$0xff] %v2021
        %2222 = vst [vmem:[%s309 + $0xf8] sm:$0xff] %v2022
        %2223 = vst [vmem:[%s309 + $0x100] sm:$0xff] %v2023
        %2224 = vst [vmem:[%s309 + $0x108] sm:$0xff] %v2024
        %2225 = vst [vmem:[%s309 + $0x110] sm:$0xff] %v2025
        %2226 = vst [vmem:[%s309 + $0x118] sm:$0xff] %v2026
        %2227 = vst [vmem:[%s309 + $0x120] sm:$0xff] %v2027
        %2228 = vst [vmem:[%s309 + $0x128] sm:$0xff] %v2028
        %2229 = vst [vmem:[%s309 + $0x130] sm:$0xff] %v2029
        %2230 = vst [vmem:[%s309 + $0x138] sm:$0xff] %v2030
        %2231 = vst [vmem:[%s309 + $0x140] sm:$0xff] %v2031
        %2232 = vst [vmem:[%s309 + $0x148] sm:$0xff] %v2032
        %2233 = vst [vmem:[%s309 + $0x150] sm:$0xff] %v2033
        %2234 = vst [vmem:[%s309 + $0x158] sm:$0xff] %v2034
        %2235 = vst [vmem:[%s309 + $0x160] sm:$0xff] %v2035
        %2236 = vst [vmem:[%s309 + $0x168] sm:$0xff] %v2036
        %2237 = vst [vmem:[%s309 + $0x170] sm:$0xff] %v2037
        %2238 = vst [vmem:[%s309 + $0x178] sm:$0xff] %v2038
        %2239 = vst [vmem:[%s309 + $0x180] sm:$0xff] %v2039
        %2240 = vst.msk [vmem:[%s309 + $0x188] sm:$0xff] %vm933, %v2040
        %2241 = vst [vmem:[%s309 + $0x190] sm:$0xff] %v2041
        %2242 = vst [vmem:[%s309 + $0x198] sm:$0xff] %v2042
        %2243 = vst [vmem:[%s309 + $0x1a0] sm:$0xff] %v2043
        %2244 = vst [vmem:[%s309 + $0x1a8] sm:$0xff] %v2044
        %2245 = vst [vmem:[%s309 + $0x1b0] sm:$0xff] %v2045
        %2246 = vst [vmem:[%s309 + $0x1b8] sm:$0xff] %v2046
        %2247 = vst [vmem:[%s309 + $0x1c0] sm:$0xff] %v2047
        %2248 = vst [vmem:[%s309 + $0x1c8] sm:$0xff] %v2048
        %2249 = vst [vmem:[%s309 + $0x1d0] sm:$0xff] %v2049
        %2250 = vst [vmem:[%s309 + $0x1d8] sm:$0xff] %v2050
        %2251 = vst [vmem:[%s309 + $0x1e0] sm:$0xff] %v2051
        %2252 = vst [vmem:[%s309 + $0x1e8] sm:$0xff] %v2052
        %2253 = vst [vmem:[%s309 + $0x1f0] sm:$0xff] %v2053
        %2254 = vst [vmem:[%s309 + $0x1f8] sm:$0xff] %v2054
        %2255 = vst [vmem:[%s309 + $0x200] sm:$0xff] %v2055
        %2256 = vst [vmem:[%s309 + $0x208] sm:$0xff] %v2056
        %2257 = vst [vmem:[%s309 + $0x210] sm:$0xff] %v2057
        %2258 = vst [vmem:[%s309 + $0x218] sm:$0xff] %v2058
        %2259 = vst [vmem:[%s309 + $0x220] sm:$0xff] %v2059
        %2260 = vst [vmem:[%s309 + $0x228] sm:$0xff] %v2060
        %2261 = vst [vmem:[%s309 + $0x230] sm:$0xff] %v2061
        %2262 = vst [vmem:[%s309 + $0x238] sm:$0xff] %v2062
        %2263 = vst [vmem:[%s309 + $0x240] sm:$0xff] %v2063
        %2264 = vst [vmem:[%s309 + $0x248] sm:$0xff] %v2064
        %2265 = vst.msk [vmem:[%s309 + $0x250] sm:$0xff] %vm933, %v2065
        %2266 = vst [vmem:[%s309 + $0x258] sm:$0xff] %v2066
        %2267 = vst [vmem:[%s309 + $0x260] sm:$0xff] %v2067
        %2268 = vst [vmem:[%s309 + $0x268] sm:$0xff] %v2068
        %2269 = vst [vmem:[%s309 + $0x270] sm:$0xff] %v2069
        %2270 = vst [vmem:[%s309 + $0x278] sm:$0xff] %v2070
        %2271 = vst [vmem:[%s309 + $0x280] sm:$0xff] %v2071
        %2272 = vst [vmem:[%s309 + $0x288] sm:$0xff] %v2072
        %2273 = vst [vmem:[%s309 + $0x290] sm:$0xff] %v2073
        %2274 = vst [vmem:[%s309 + $0x298] sm:$0xff] %v2074
        %2275 = vst [vmem:[%s309 + $0x2a0] sm:$0xff] %v2075
        %2276 = vst [vmem:[%s309 + $0x2a8] sm:$0xff] %v2076
        %2277 = vst [vmem:[%s309 + $0x2b0] sm:$0xff] %v2077
        %2278 = vst [vmem:[%s309 + $0x2b8] sm:$0xff] %v2078
        %2279 = vst [vmem:[%s309 + $0x2c0] sm:$0xff] %v2079
        %2280 = vst [vmem:[%s309 + $0x2c8] sm:$0xff] %v2080
        %2281 = vst [vmem:[%s309 + $0x2d0] sm:$0xff] %v2081
        %2282 = vst [vmem:[%s309 + $0x2d8] sm:$0xff] %v2082
        %2283 = vst [vmem:[%s309 + $0x2e0] sm:$0xff] %v2083
        %2284 = vst [vmem:[%s309 + $0x2e8] sm:$0xff] %v2084
        %2285 = vst [vmem:[%s309 + $0x2f0] sm:$0xff] %v2085
        %2286 = vst [vmem:[%s309 + $0x2f8] sm:$0xff] %v2086
        %2287 = vst [vmem:[%s309 + $0x300] sm:$0xff] %v2087
        %2288 = vst [vmem:[%s309 + $0x308] sm:$0xff] %v2088
        %2289 = vst [vmem:[%s309 + $0x310] sm:$0xff] %v2089
        %2290 = vst.msk [vmem:[%s309 + $0x318] sm:$0xff] %vm933, %v2090
        %2291 = vst [vmem:[%s309 + $0x320] sm:$0xff] %v2091
        %2292 = vst [vmem:[%s309 + $0x328] sm:$0xff] %v2092
        %2293 = vst [vmem:[%s309 + $0x330] sm:$0xff] %v2093
        %2294 = vst [vmem:[%s309 + $0x338] sm:$0xff] %v2094
        %2295 = vst [vmem:[%s309 + $0x340] sm:$0xff] %v2095
        %2296 = vst [vmem:[%s309 + $0x348] sm:$0xff] %v2096
        %2297 = vst [vmem:[%s309 + $0x350] sm:$0xff] %v2097
        %2298 = vst [vmem:[%s309 + $0x358] sm:$0xff] %v2098
        %2299 = vst [vmem:[%s309 + $0x360] sm:$0xff] %v2099
        %2300 = vst [vmem:[%s309 + $0x368] sm:$0xff] %v2100
        %2301 = vst [vmem:[%s309 + $0x370] sm:$0xff] %v2101
        %2302 = vst [vmem:[%s309 + $0x378] sm:$0xff] %v2102
        %2303 = vst [vmem:[%s309 + $0x380] sm:$0xff] %v2103
        %2304 = vst [vmem:[%s309 + $0x388] sm:$0xff] %v2104
        %2305 = vst [vmem:[%s309 + $0x390] sm:$0xff] %v2105
        %2306 = vst [vmem:[%s309 + $0x398] sm:$0xff] %v2106
        %2307 = vst [vmem:[%s309 + $0x3a0] sm:$0xff] %v2107
        %2308 = vst [vmem:[%s309 + $0x3a8] sm:$0xff] %v2108
        %2309 = vst [vmem:[%s309 + $0x3b0] sm:$0xff] %v2109
        %2310 = vst [vmem:[%s309 + $0x3b8] sm:$0xff] %v2110
        %2311 = vst [vmem:[%s309 + $0x3c0] sm:$0xff] %v2111
        %2312 = vst [vmem:[%s309 + $0x3c8] sm:$0xff] %v2112
        %2313 = vst [vmem:[%s309 + $0x3d0] sm:$0xff] %v2113
        %2314 = vst [vmem:[%s309 + $0x3d8] sm:$0xff] %v2114
        %2315 = vst.msk [vmem:[%s309 + $0x3e0] sm:$0xff] %vm933, %v2115
        %2316 = vst [vmem:[%s309 + $0x3e8] sm:$0xff] %v2116
        %2317 = vst [vmem:[%s309 + $0x3f0] sm:$0xff] %v2117
        %2318 = vst [vmem:[%s309 + $0x3f8] sm:$0xff] %v2118
        %2319 = vst [vmem:[%s309 + $0x400] sm:$0xff] %v2119
        %2320 = vst [vmem:[%s309 + $0x408] sm:$0xff] %v2120
        %2321 = vst [vmem:[%s309 + $0x410] sm:$0xff] %v2121
        %2322 = vst [vmem:[%s309 + $0x418] sm:$0xff] %v2122
        %2323 = vst [vmem:[%s309 + $0x420] sm:$0xff] %v2123
        %2324 = vst [vmem:[%s309 + $0x428] sm:$0xff] %v2124
        %2325 = vst [vmem:[%s309 + $0x430] sm:$0xff] %v2125
        %2326 = vst [vmem:[%s309 + $0x438] sm:$0xff] %v2126
        %2327 = vst [vmem:[%s309 + $0x440] sm:$0xff] %v2127
        %2328 = vst [vmem:[%s309 + $0x448] sm:$0xff] %v2128
        %2329 = vst [vmem:[%s309 + $0x450] sm:$0xff] %v2129
        %2330 = vst [vmem:[%s309 + $0x458] sm:$0xff] %v2130
        %2331 = vst [vmem:[%s309 + $0x460] sm:$0xff] %v2131
        %2332 = vst [vmem:[%s309 + $0x468] sm:$0xff] %v2132
        %2333 = vst [vmem:[%s309 + $0x470] sm:$0xff] %v2133
        %2334 = vst [vmem:[%s309 + $0x478] sm:$0xff] %v2134
        %2335 = vst [vmem:[%s309 + $0x480] sm:$0xff] %v2135
        %2336 = vst [vmem:[%s309 + $0x488] sm:$0xff] %v2136
        %2337 = vst [vmem:[%s309 + $0x490] sm:$0xff] %v2137
        %2338 = vst [vmem:[%s309 + $0x498] sm:$0xff] %v2138
        %2339 = vst [vmem:[%s309 + $0x4a0] sm:$0xff] %v2139
        %2340 = vst.msk [vmem:[%s309 + $0x4a8] sm:$0xff] %vm933, %v2140
        %2341 = vst [vmem:[%s309 + $0x4b0] sm:$0xff] %v2141
        %2342 = vst [vmem:[%s309 + $0x4b8] sm:$0xff] %v2142
        %2343 = vst [vmem:[%s309 + $0x4c0] sm:$0xff] %v2143
        %2344 = vst [vmem:[%s309 + $0x4c8] sm:$0xff] %v2144
        %2345 = vst [vmem:[%s309 + $0x4d0] sm:$0xff] %v2145
        %2346 = vst [vmem:[%s309 + $0x4d8] sm:$0xff] %v2146
        %2347 = vst [vmem:[%s309 + $0x4e0] sm:$0xff] %v2147
        %2348 = vst [vmem:[%s309 + $0x4e8] sm:$0xff] %v2148
        %2349 = vst [vmem:[%s309 + $0x4f0] sm:$0xff] %v2149
        %2350 = vst [vmem:[%s309 + $0x4f8] sm:$0xff] %v2150
        %2351 = vst [vmem:[%s309 + $0x500] sm:$0xff] %v2151
        %2352 = vst [vmem:[%s309 + $0x508] sm:$0xff] %v2152
        %2353 = vst [vmem:[%s309 + $0x510] sm:$0xff] %v2153
        %2354 = vst [vmem:[%s309 + $0x518] sm:$0xff] %v2154
        %2355 = vst [vmem:[%s309 + $0x520] sm:$0xff] %v2155
        %2356 = vst [vmem:[%s309 + $0x528] sm:$0xff] %v2156
        %2357 = vst [vmem:[%s309 + $0x530] sm:$0xff] %v2157
        %2358 = vst [vmem:[%s309 + $0x538] sm:$0xff] %v2158
        %2359 = vst [vmem:[%s309 + $0x540] sm:$0xff] %v2159
        %2360 = vst [vmem:[%s309 + $0x548] sm:$0xff] %v2160
        %2361 = vst [vmem:[%s309 + $0x550] sm:$0xff] %v2161
        %2362 = vst [vmem:[%s309 + $0x558] sm:$0xff] %v2162
        %2363 = vst [vmem:[%s309 + $0x560] sm:$0xff] %v2163
        %2364 = vst [vmem:[%s309 + $0x568] sm:$0xff] %v2164
        %2365 = vst.msk [vmem:[%s309 + $0x570] sm:$0xff] %vm933, %v2165
        %2366 = vst [vmem:[%s309 + $0x578] sm:$0xff] %v2166
        %2367 = vst [vmem:[%s309 + $0x580] sm:$0xff] %v2167
        %2368 = vst [vmem:[%s309 + $0x588] sm:$0xff] %v2168
        %2369 = vst [vmem:[%s309 + $0x590] sm:$0xff] %v2169
        %2370 = vst [vmem:[%s309 + $0x598] sm:$0xff] %v2170
        %2371 = vst [vmem:[%s309 + $0x5a0] sm:$0xff] %v2171
        %2372 = vst [vmem:[%s309 + $0x5a8] sm:$0xff] %v2172
        %2373 = vst [vmem:[%s309 + $0x5b0] sm:$0xff] %v2173
        %2374 = vst [vmem:[%s309 + $0x5b8] sm:$0xff] %v2174
        %2375 = vst [vmem:[%s309 + $0x5c0] sm:$0xff] %v2175
        %2376 = vst [vmem:[%s309 + $0x5c8] sm:$0xff] %v2176
        %2377 = vst [vmem:[%s309 + $0x5d0] sm:$0xff] %v2177
        %2378 = vst [vmem:[%s309 + $0x5d8] sm:$0xff] %v2178
        %2379 = vst [vmem:[%s309 + $0x5e0] sm:$0xff] %v2179
        %2380 = vst [vmem:[%s309 + $0x5e8] sm:$0xff] %v2180
        %2381 = vst [vmem:[%s309 + $0x5f0] sm:$0xff] %v2181
        %2382 = vst [vmem:[%s309 + $0x5f8] sm:$0xff] %v2182
        %2383 = vst [vmem:[%s309 + $0x600] sm:$0xff] %v2183
        %2384 = vst [vmem:[%s309 + $0x608] sm:$0xff] %v2184
        %2385 = vst [vmem:[%s309 + $0x610] sm:$0xff] %v2185
        %2386 = vst [vmem:[%s309 + $0x618] sm:$0xff] %v2186
        %2387 = vst [vmem:[%s309 + $0x620] sm:$0xff] %v2187
        %2388 = vst [vmem:[%s309 + $0x628] sm:$0xff] %v2188
        %2389 = vst [vmem:[%s309 + $0x630] sm:$0xff] %v2189
        %2390 = vst.msk [vmem:[%s309 + $0x638] sm:$0xff] %vm933, %v2190
        %s2391 = sand.u32 %s149, 1
        %s2392 = scalar_lea.sflag [#allocation4], %s2391
        %s2393 = sand.u32 %s149, 1
        %s2394 = smul.addr %s2393, 1600
        %s2395 = scalar_lea.vmem [#allocation10], %s2394
        // Predicated region
        $region57: #{tpu_custom_call.1} parent=39 // pred_check
          %p2396 = pneg %p159
        $region58: #{tpu_custom_call.1} parent=39 // pred_check_branch
          %2398 = sbr.rel (%p2396) target = $region60
        $region59: #{tpu_custom_call.1} parent=39 // pred_region
          %s2400 = ssub.s32 25600, 25600
          %2401 = vsyncadd %s2392, %s2400
          %s2402 = smul.addr %s26, 200
          %s2403 = smul.addr %s2402, 128
          %s2404 = scalar_lea.hbm %s5, %s2403
          %s2405 = sshll.u32 %s2395, 4
          %s2406 = int_to_ptr.vmem [resolvable:$true] %s2405
          %2411 = dma.vmem_to_hbm [thread:$0]  %s2406, 25600, %s2404, %s2392, 3200, 3200, 200
        $region60: #{tpu_custom_call.1} parent=39 // pred_fallthru
          _
      $region40: #{tpu_custom_call.1} parent=5 // pred_fallthru
        _
      %p2412 = scmp.le.s32.totalorder 2, %s21
      // Predicated region
      $region61: #{tpu_custom_call.1} parent=5 // pred_check
        %p2413 = pneg %p2412
      $region62: #{tpu_custom_call.1} parent=5 // pred_check_branch
        %2415 = sbr.rel (%p2413) target = $region64
      $region63: #{tpu_custom_call.1} parent=5 // pred_region
        %s2416 = ssub.s32 %s21, 2
        // Predicated region
        $region65: #{tpu_custom_call.1} parent=63 // pred_check
          %p2417 = pneg %p165
        $region66: #{tpu_custom_call.1} parent=63 // pred_check_branch
          %2419 = sbr.rel (%p2417) target = $region68
        $region67: #{tpu_custom_call.1} parent=63 // pred_region
          %s2420 = sand.u32 %s150, 1
          %s2421 = scalar_lea.sflag [#allocation4], %s2420
          %s2422 = sand.u32 %s150, 1
          %s2423 = smul.addr %s2422, 1600
          %s2424 = scalar_lea.vmem [#allocation10], %s2423
          %2425 = dma.done %s2421, 25600
        $region68: #{tpu_custom_call.1} parent=63 // pred_fallthru
          _
      $region64: #{tpu_custom_call.1} parent=5 // pred_fallthru
        _
    $region6: #{tpu_custom_call.1} parent=1 // loop_footer
      %s25 = sadd.s32 1, %s21
    $region7: #{tpu_custom_call.1} parent=1 // loop_footer_branch
      %20 = sbr.rel target = $region3
    $region8: #{tpu_custom_call.1} parent=1 // loop_exit
      _
    %2426 = vsyncpa [#allocation3], 1
    %s2427 = scalar_lea.sflag [#allocation3], 1
    %2428 = vsyncpa %s2427, 1
    %2429 = vsyncpa [#allocation6], 1
    %s2430 = scalar_lea.sflag [#allocation6], 1
    %2431 = vsyncpa %s2430, 1
    %2432 = vsyncpa [#allocation9], 1
    %2433 = vsyncpa [#allocation4], 1
    %s2434 = scalar_lea.sflag [#allocation4], 1
    %2435 = vsyncpa %s2434, 1

</llo_original>
